<compile_context>
chip_gen: v7x
topology: tpu7x:2x2x1
jax: 0.10.0
libtpu: 0.0.40
codegen_flags: <defaults>
</compile_context>

<pallas_src>
import math
import functools

import numpy as np
import jax
import jax.numpy as jnp
from jax.experimental import pallas as pl
from jax.experimental.pallas import tpu as pltpu


# Row indices inside the packed (6, D) per-layer vector bundle.
_BO, _B2, _G1, _BE1, _G2, _BE2 = range(6)


def _layer_norm_f32(z, g, b, eps=1e-5):
    mu = jnp.mean(z, axis=-1, keepdims=True)
    var = jnp.mean((z - mu) ** 2, axis=-1, keepdims=True)
    return (z - mu) * jax.lax.rsqrt(var + eps) * g + b


# ----------------------------------------------------------------------------
# Fused kernel: one grid step = (batch element b, encoder layer l)
# ----------------------------------------------------------------------------
def encoder_stack_kernel(x_ref, wqkv_ref, bqkv_ref, wo_ref, w1_ref, b1_ref,
                         w2_ref, vecd_ref, o_ref, x_scr, cat_scr, *, n_heads):
    layer = pl.program_id(1)
    n_layers = pl.num_programs(1)

    # Load this batch element's tokens into the resident activation scratch.
    @pl.when(layer == 0)
    def _():
        x_scr[...] = x_ref[0]

    x = x_scr[...]                               # (L, D) float32
    L, D = x.shape
    H = n_heads
    dk = D // H
    scale = 1.0 / math.sqrt(dk)                  # PyTorch SelfAttention: 1/sqrt(d_k)

    vecd = vecd_ref[0]                           # (6, D) packed bias / LN vectors

    # ---- fused QKV projection: ONE (L,D) @ (D,3D) matmul (bf16 in, f32 acc) --
    xb = x.astype(jnp.bfloat16)
    qkv = jnp.dot(xb, wqkv_ref[0],
                  preferred_element_type=jnp.float32) + bqkv_ref[0]   # (L, 3D)
    qkvb = qkv.astype(jnp.bfloat16)

    # ---- split heads to (H, L, dk) with static lane slices (batch dim leads) -
    def split_heads(col_off):
        return jnp.stack(
            [qkvb[:, col_off + h * dk: col_off + (h + 1) * dk] for h in range(H)],
            axis=0)                                                   # (H, L, dk)

    qh = split_heads(0)
    kh = split_heads(D)
    vh = split_heads(2 * D)

    # ---- batched scaled-dot-product attention (single MXU op per stage) -----
    s = jnp.einsum('hld,hsd->hls', qh, kh,
                   preferred_element_type=jnp.float32) * scale        # (H, L, S)
    s = s - jnp.max(s, axis=-1, keepdims=True)
    p = jnp.exp(s)
    p = p * pl.reciprocal(jnp.sum(p, axis=-1, keepdims=True), approx=True)
    # (dropout on attention probabilities is identity in eval mode)
    oh = jnp.einsum('hls,hsd->hld', p.astype(jnp.bfloat16), vh,
                    preferred_element_type=jnp.float32)               # (H, L, dk)

    # ---- fused output projection: concat heads, ONE (L,D) @ (D,D) matmul ----
    for h in range(H):                           # cheap VMEM stores, no matmuls
        cat_scr[:, h * dk:(h + 1) * dk] = oh[h].astype(jnp.bfloat16)
    attn_out = jnp.dot(cat_scr[...], wo_ref[0],
                       preferred_element_type=jnp.float32)
    attn_out = attn_out + vecd[_BO:_BO + 1, :]

    # ---- residual + LayerNorm 1 (f32) ---------------------------------------
    x1 = _layer_norm_f32(x + attn_out,
                         vecd[_G1:_G1 + 1, :], vecd[_BE1:_BE1 + 1, :])

    # ---- position-wise FFN (Conv1d k=1 == Linear), residual, LayerNorm 2 ----
    h1 = jnp.dot(x1.astype(jnp.bfloat16), w1_ref[0],
                 preferred_element_type=jnp.float32) + b1_ref[0]      # (L, d_ff)
    h1 = jnp.maximum(h1, 0.0)                                         # ReLU
    y = jnp.dot(h1.astype(jnp.bfloat16), w2_ref[0],
                preferred_element_type=jnp.float32) + vecd[_B2:_B2 + 1, :]
    x2 = _layer_norm_f32(x1 + y, vecd[_G2:_G2 + 1, :], vecd[_BE2:_BE2 + 1, :])

    x_scr[...] = x2                              # carry activation to next layer

    # ---- write the HBM output block only after the last layer ---------------
    @pl.when(layer == n_layers - 1)
    def _():
        o_ref[0] = x2


# ----------------------------------------------------------------------------
# Wrapper: stack per-layer params and call the fused kernel once
# ----------------------------------------------------------------------------
def _stack_layer_params(layer_params):
    """Stack per-layer dicts into fused, layer-leading arrays (bf16 weights)."""
    def cat(fn):
        return jnp.stack([fn(p) for p in layer_params], axis=0)

    wqkv = cat(lambda p: jnp.concatenate([p['wq'], p['wk'], p['wv']], axis=1)
               ).astype(jnp.bfloat16)                                # (NL, D, 3D)
    bqkv = cat(lambda p: jnp.concatenate([p['bq'], p['bk'], p['bv']], axis=1))
    wo = cat(lambda p: p['wo']).astype(jnp.bfloat16)                 # (NL, D, D)
    w1 = cat(lambda p: p['w1']).astype(jnp.bfloat16)                 # (NL, D, d_ff)
    b1 = cat(lambda p: p['b1'])                                      # (NL, 1, d_ff)
    w2 = cat(lambda p: p['w2']).astype(jnp.bfloat16)                 # (NL, d_ff, D)
    vecd = cat(lambda p: jnp.concatenate(                            # (NL, 6, D)
        [p['bo'], p['b2'], p['g1'], p['be1'], p['g2'], p['be2']], axis=0))
    return wqkv, bqkv, wo, w1, b1, w2, vecd


def encoder_forward(x, layer_params, n_heads):
    """Encoder.forward with conv_layers=None, norm_layer=None,
    output_attention=False (so every attn is None)."""
    B, L, D = x.shape
    NL = len(layer_params)
    d_ff = layer_params[0]['w1'].shape[1]
    assert D % n_heads == 0

    wqkv, bqkv, wo, w1, b1, w2, vecd = _stack_layer_params(layer_params)
    kernel = functools.partial(encoder_stack_kernel, n_heads=n_heads)

    def batch_map(b, l):     # activations / output: indexed by batch only
        return (b, 0, 0)

    def layer_map(b, l):     # weights: indexed by layer only
        return (l, 0, 0)

    in_specs = [
        pl.BlockSpec((1, L, D), batch_map),            # x
        pl.BlockSpec((1, D, 3 * D), layer_map),        # wqkv (bf16)
        pl.BlockSpec((1, 1, 3 * D), layer_map),        # bqkv
        pl.BlockSpec((1, D, D), layer_map),            # wo   (bf16)
        pl.BlockSpec((1, D, d_ff), layer_map),         # w1   (bf16)
        pl.BlockSpec((1, 1, d_ff), layer_map),         # b1
        pl.BlockSpec((1, d_ff, D), layer_map),         # w2   (bf16)
        pl.BlockSpec((1, 6, D), layer_map),            # packed bias/LN vectors
    ]
    out_specs = pl.BlockSpec((1, L, D), batch_map)

    out = pl.pallas_call(
        kernel,
        out_shape=jax.ShapeDtypeStruct((B, L, D), jnp.float32),
        grid_spec=pltpu.PrefetchScalarGridSpec(
            num_scalar_prefetch=0,
            grid=(B, NL),                              # layer axis last (fastest)
            in_specs=in_specs,
            out_specs=out_specs,
            scratch_shapes=[pltpu.VMEM((L, D), jnp.float32),      # resident x
                            pltpu.VMEM((L, D), jnp.bfloat16)]),   # head concat
        compiler_params=pltpu.CompilerParams(
            dimension_semantics=("parallel", "arbitrary"),
            vmem_limit_bytes=32 * 1024 * 1024),
    )(x, wqkv, bqkv, wo, w1, b1, w2, vecd)

    return out, [None] * NL


# ----------------------------------------------------------------------------
# Deterministic parameter init (shapes per the PyTorch module __init__)
# ----------------------------------------------------------------------------
def _linear(key, fan_in, fan_out):
    lim = 1.0 / math.sqrt(fan_in)
    kw, kb = jax.random.split(key)
    w = jax.random.uniform(kw, (fan_in, fan_out), jnp.float32, -lim, lim)
    b = jax.random.uniform(kb, (1, fan_out), jnp.float32, -lim, lim)
    return w, b


def init_encoder_params(key, d_model, enc_layers, d_ff):
    params = []
    for i in range(enc_layers):
        lkey = jax.random.fold_in(key, i)
        ks = jax.random.split(lkey, 6)
        wq, bq = _linear(ks[0], d_model, d_model)
        wk, bk = _linear(ks[1], d_model, d_model)
        wv, bv = _linear(ks[2], d_model, d_model)
        wo, bo = _linear(ks[3], d_model, d_model)
        w1, b1 = _linear(ks[4], d_model, d_ff)   # conv1 (kernel_size=1)
        w2, b2 = _linear(ks[5], d_ff, d_model)   # conv2 (kernel_size=1)
        params.append(dict(
            wq=wq, bq=bq, wk=wk, bk=bk, wv=wv, bv=bv, wo=wo, bo=bo,
            w1=w1, b1=b1, w2=w2, b2=b2,
            g1=jnp.ones((1, d_model), jnp.float32),
            be1=jnp.zeros((1, d_model), jnp.float32),
            g2=jnp.ones((1, d_model), jnp.float32),
            be2=jnp.zeros((1, d_model), jnp.float32),
        ))
    return params


# ----------------------------------------------------------------------------
# Pure-JAX f32 reference (mirrors the PyTorch forward in eval mode)
# ----------------------------------------------------------------------------
def _layer_norm(x, g, b, eps=1e-5):
    mu = jnp.mean(x, axis=-1, keepdims=True)
    var = jnp.mean((x - mu) ** 2, axis=-1, keepdims=True)
    return (x - mu) * jax.lax.rsqrt(var + eps) * g + b


def encoder_ref(x, layer_params, n_heads):
    for p in layer_params:
        B, L, D = x.shape
        dk = D // n_heads
        q = (x @ p['wq'] + p['bq']).reshape(B, L, n_heads, dk)
        k = (x @ p['wk'] + p['bk']).reshape(B, L, n_heads, dk)
        v = (x @ p['wv'] + p['bv']).reshape(B, L, n_heads, dk)
        scores = jnp.einsum('blhd,bshd->bhls', q, k) / math.sqrt(dk)
        A = jax.nn.softmax(scores, axis=-1)
        o = jnp.einsum('bhls,bshd->blhd', A, v).reshape(B, L, D)
        attn_out = o @ p['wo'] + p['bo']
        xn = _layer_norm(x + attn_out, p['g1'], p['be1'])
        y = jnp.maximum(xn @ p['w1'] + p['b1'], 0.0) @ p['w2'] + p['b2']
        x = _layer_norm(xn + y, p['g2'], p['be2'])
    return x


# ----------------------------------------------------------------------------
if __name__ == "__main__":
    B, L, D_MODEL, N_HEADS, D_FF, N_LAYERS = 2, 8, 32, 4, 64, 2

    key = jax.random.PRNGKey(0)
    x = jax.random.normal(jax.random.fold_in(key, 1000), (B, L, D_MODEL),
                          jnp.float32)
    params = init_encoder_params(key, D_MODEL, N_LAYERS, D_FF)

    out, attns = encoder_forward(x, params, N_HEADS)
    out = jax.block_until_ready(out)

    ref = encoder_ref(x, params, N_HEADS)
    assert out.shape == (B, L, D_MODEL)
    assert all(a is None for a in attns)          # output_attention=False
    # bf16 matmul inputs (f32 accumulation) + approx-reciprocal softmax =>
    # looser tolerance vs. the pure-f32 reference.
    diff = float(np.max(np.abs(np.asarray(out) - np.asarray(ref))))
    assert np.allclose(np.asarray(out), np.asarray(ref),
                       rtol=8e-2, atol=8e-2), diff

    print("KERNEL_OK")
</pallas_src>

<mosaic_0001>
module attributes {stable_mosaic.version = 11 : i64} {
  func.func @encoder_stack_kernel(%arg0: i32, %arg1: i32, %arg2: memref<1x8x32xf32, #tpu.memory_space<vmem>>, %arg3: memref<1x32x96xbf16, #tpu.memory_space<vmem>>, %arg4: memref<1x1x96xf32, #tpu.memory_space<vmem>>, %arg5: memref<1x32x32xbf16, #tpu.memory_space<vmem>>, %arg6: memref<1x32x64xbf16, #tpu.memory_space<vmem>>, %arg7: memref<1x1x64xf32, #tpu.memory_space<vmem>>, %arg8: memref<1x64x32xbf16, #tpu.memory_space<vmem>>, %arg9: memref<1x6x32xf32, #tpu.memory_space<vmem>>, %arg10: memref<1x8x32xf32, #tpu.memory_space<vmem>>, %arg11: memref<8x32xf32, #tpu.memory_space<vmem>>, %arg12: memref<8x32xbf16, #tpu.memory_space<vmem>>) attributes {dimension_semantics = [#tpu.dimension_semantics<parallel>, #tpu.dimension_semantics<arbitrary>], iteration_bounds = array<i64: 2, 2>, scalar_prefetch = 0 : i64, scratch_operands = 2 : i64, tpu.core_type = #tpu.core_type<tc>, window_params = [{transform_indices = @transform_0, window_bounds = array<i64: 1, 8, 32>}, {transform_indices = @transform_1, window_bounds = array<i64: 1, 32, 96>}, {transform_indices = @transform_2, window_bounds = array<i64: 1, 1, 96>}, {transform_indices = @transform_3, window_bounds = array<i64: 1, 32, 32>}, {transform_indices = @transform_4, window_bounds = array<i64: 1, 32, 64>}, {transform_indices = @transform_5, window_bounds = array<i64: 1, 1, 64>}, {transform_indices = @transform_6, window_bounds = array<i64: 1, 64, 32>}, {transform_indices = @transform_7, window_bounds = array<i64: 1, 6, 32>}, {transform_indices = @transform_8, window_bounds = array<i64: 1, 8, 32>}]} {
    %c0_i32 = arith.constant 0 : i32
    %0 = arith.cmpi eq, %arg1, %c0_i32 : i32
    %1 = arith.extui %0 : i1 to i32
    %c0_i32_0 = arith.constant 0 : i32
    %2 = arith.cmpi ne, %1, %c0_i32_0 : i32
    scf.if %2 {
      %c0_52 = arith.constant 0 : index
      %c0_53 = arith.constant 0 : index
      %c0_54 = arith.constant 0 : index
      %151 = vector.load %arg2[%c0_52, %c0_53, %c0_54] : memref<1x8x32xf32, #tpu.memory_space<vmem>>, vector<1x8x32xf32>
      %152 = vector.shape_cast %151 : vector<1x8x32xf32> to vector<8x32xf32>
      %c0_55 = arith.constant 0 : index
      %c0_56 = arith.constant 0 : index
      %153 = vector.load %arg11[%c0_55, %c0_56] : memref<8x32xf32, #tpu.memory_space<vmem>>, vector<8x32xf32>
      tpu.vector_store %arg11[%c0_55, %c0_56], %152 {strides = array<i32>} : memref<8x32xf32, #tpu.memory_space<vmem>>, vector<8x32xf32>,
    } else {
    }
    %c0 = arith.constant 0 : index
    %c0_1 = arith.constant 0 : index
    %3 = vector.load %arg11[%c0, %c0_1] : memref<8x32xf32, #tpu.memory_space<vmem>>, vector<8x32xf32>
    %c0_2 = arith.constant 0 : index
    %c0_3 = arith.constant 0 : index
    %c0_4 = arith.constant 0 : index
    %4 = vector.load %arg9[%c0_2, %c0_3, %c0_4] : memref<1x6x32xf32, #tpu.memory_space<vmem>>, vector<1x6x32xf32>
    %5 = vector.shape_cast %4 : vector<1x6x32xf32> to vector<6x32xf32>
    %6 = arith.truncf %3 : vector<8x32xf32> to vector<8x32xbf16>
    %c0_5 = arith.constant 0 : index
    %c0_6 = arith.constant 0 : index
    %c0_7 = arith.constant 0 : index
    %7 = vector.load %arg3[%c0_5, %c0_6, %c0_7] : memref<1x32x96xbf16, #tpu.memory_space<vmem>>, vector<1x32x96xbf16>
    %8 = vector.shape_cast %7 : vector<1x32x96xbf16> to vector<32x96xbf16>
    %cst = arith.constant dense<0.000000e+00> : vector<8x96xf32>
    %9 = tpu.matmul %6, %8, %cst {dimension_numbers = #tpu.dot_dimension_numbers<[1], [0], [0], [1], [0, 0, 1, 1], [], []>} : vector<8x32xbf16>, vector<32x96xbf16>, vector<8x96xf32> -> vector<8x96xf32>
    %c0_8 = arith.constant 0 : index
    %c0_9 = arith.constant 0 : index
    %c0_10 = arith.constant 0 : index
    %10 = vector.load %arg4[%c0_8, %c0_9, %c0_10] : memref<1x1x96xf32, #tpu.memory_space<vmem>>, vector<1x1x96xf32>
    %11 = vector.shape_cast %10 : vector<1x1x96xf32> to vector<1x96xf32>
    %12 = vector.broadcast %11 : vector<1x96xf32> to vector<8x96xf32>
    %13 = arith.addf %9, %12 : vector<8x96xf32>
    %14 = arith.truncf %13 : vector<8x96xf32> to vector<8x96xbf16>
    %15 = vector.extract_strided_slice %14 {offsets = [0, 0], sizes = [8, 8], strides = [1, 1]} : vector<8x96xbf16> to vector<8x8xbf16>
    %16 = vector.extract_strided_slice %14 {offsets = [0, 8], sizes = [8, 8], strides = [1, 1]} : vector<8x96xbf16> to vector<8x8xbf16>
    %17 = vector.extract_strided_slice %14 {offsets = [0, 16], sizes = [8, 8], strides = [1, 1]} : vector<8x96xbf16> to vector<8x8xbf16>
    %18 = vector.extract_strided_slice %14 {offsets = [0, 24], sizes = [8, 8], strides = [1, 1]} : vector<8x96xbf16> to vector<8x8xbf16>
    %19 = vector.shape_cast %15 : vector<8x8xbf16> to vector<1x8x8xbf16>
    %20 = vector.shape_cast %16 : vector<8x8xbf16> to vector<1x8x8xbf16>
    %21 = vector.shape_cast %17 : vector<8x8xbf16> to vector<1x8x8xbf16>
    %22 = vector.shape_cast %18 : vector<8x8xbf16> to vector<1x8x8xbf16>
    %23 = tpu.concatenate %19, %20, %21, %22 in 0 : vector<1x8x8xbf16>, vector<1x8x8xbf16>, vector<1x8x8xbf16>, vector<1x8x8xbf16> -> vector<4x8x8xbf16>
    %24 = vector.extract_strided_slice %14 {offsets = [0, 32], sizes = [8, 8], strides = [1, 1]} : vector<8x96xbf16> to vector<8x8xbf16>
    %25 = vector.extract_strided_slice %14 {offsets = [0, 40], sizes = [8, 8], strides = [1, 1]} : vector<8x96xbf16> to vector<8x8xbf16>
    %26 = vector.extract_strided_slice %14 {offsets = [0, 48], sizes = [8, 8], strides = [1, 1]} : vector<8x96xbf16> to vector<8x8xbf16>
    %27 = vector.extract_strided_slice %14 {offsets = [0, 56], sizes = [8, 8], strides = [1, 1]} : vector<8x96xbf16> to vector<8x8xbf16>
    %28 = vector.shape_cast %24 : vector<8x8xbf16> to vector<1x8x8xbf16>
    %29 = vector.shape_cast %25 : vector<8x8xbf16> to vector<1x8x8xbf16>
    %30 = vector.shape_cast %26 : vector<8x8xbf16> to vector<1x8x8xbf16>
    %31 = vector.shape_cast %27 : vector<8x8xbf16> to vector<1x8x8xbf16>
    %32 = tpu.concatenate %28, %29, %30, %31 in 0 : vector<1x8x8xbf16>, vector<1x8x8xbf16>, vector<1x8x8xbf16>, vector<1x8x8xbf16> -> vector<4x8x8xbf16>
    %33 = vector.extract_strided_slice %14 {offsets = [0, 64], sizes = [8, 8], strides = [1, 1]} : vector<8x96xbf16> to vector<8x8xbf16>
    %34 = vector.extract_strided_slice %14 {offsets = [0, 72], sizes = [8, 8], strides = [1, 1]} : vector<8x96xbf16> to vector<8x8xbf16>
    %35 = vector.extract_strided_slice %14 {offsets = [0, 80], sizes = [8, 8], strides = [1, 1]} : vector<8x96xbf16> to vector<8x8xbf16>
    %36 = vector.extract_strided_slice %14 {offsets = [0, 88], sizes = [8, 8], strides = [1, 1]} : vector<8x96xbf16> to vector<8x8xbf16>
    %37 = vector.shape_cast %33 : vector<8x8xbf16> to vector<1x8x8xbf16>
    %38 = vector.shape_cast %34 : vector<8x8xbf16> to vector<1x8x8xbf16>
    %39 = vector.shape_cast %35 : vector<8x8xbf16> to vector<1x8x8xbf16>
    %40 = vector.shape_cast %36 : vector<8x8xbf16> to vector<1x8x8xbf16>
    %41 = tpu.concatenate %37, %38, %39, %40 in 0 : vector<1x8x8xbf16>, vector<1x8x8xbf16>, vector<1x8x8xbf16>, vector<1x8x8xbf16> -> vector<4x8x8xbf16>
    "tpu.trace_start"() <{level = 10 : i32, message = "hld,hsd->hls"}> : () -> ()
    %cst_11 = arith.constant dense<0.000000e+00> : vector<4x8x8xf32>
    %42 = tpu.matmul %23, %32, %cst_11 {dimension_numbers = #tpu.dot_dimension_numbers<[2], [2], [1], [1], [0, 0, 0, 1, 1, 1], [0], [0]>} : vector<4x8x8xbf16>, vector<4x8x8xbf16>, vector<4x8x8xf32> -> vector<4x8x8xf32>
    "tpu.trace_stop"() : () -> ()
    %cst_12 = arith.constant 0.353553385 : f32
    %43 = vector.broadcast %cst_12 : f32 to vector<4x8x8xf32>
    %44 = arith.mulf %42, %43 : vector<4x8x8xf32>
    %cst_13 = arith.constant dense<0xFF800000> : vector<4x8xf32>
    %45 = vector.multi_reduction <maximumf>, %44, %cst_13 [2] : vector<4x8x8xf32> to vector<4x8xf32>
    %46 = vector.shape_cast %45 : vector<4x8xf32> to vector<4x8x1xf32>
    %47 = vector.broadcast %46 : vector<4x8x1xf32> to vector<4x8x8xf32>
    %48 = arith.subf %44, %47 : vector<4x8x8xf32>
    %49 = math.exp %48 : vector<4x8x8xf32>
    %cst_14 = arith.constant dense<0.000000e+00> : vector<4x8xf32>
    %50 = vector.multi_reduction <add>, %49, %cst_14 [2] : vector<4x8x8xf32> to vector<4x8xf32>
    %51 = vector.shape_cast %50 : vector<4x8xf32> to vector<4x8x1xf32>
    %52 = tpu.reciprocal %51 {approx = true} : vector<4x8x1xf32> -> vector<4x8x1xf32>
    %53 = vector.broadcast %52 : vector<4x8x1xf32> to vector<4x8x8xf32>
    %54 = arith.mulf %49, %53 : vector<4x8x8xf32>
    %55 = arith.truncf %54 : vector<4x8x8xf32> to vector<4x8x8xbf16>
    "tpu.trace_start"() <{level = 10 : i32, message = "hls,hsd->hld"}> : () -> ()
    %cst_15 = arith.constant dense<0.000000e+00> : vector<4x8x8xf32>
    %56 = tpu.matmul %55, %41, %cst_15 {dimension_numbers = #tpu.dot_dimension_numbers<[2], [1], [1], [2], [0, 0, 0, 1, 1, 2], [0], [0]>} : vector<4x8x8xbf16>, vector<4x8x8xbf16>, vector<4x8x8xf32> -> vector<4x8x8xf32>
    "tpu.trace_stop"() : () -> ()
    %57 = vector.extract_strided_slice %56 {offsets = [0, 0, 0], sizes = [1, 8, 8], strides = [1, 1, 1]} : vector<4x8x8xf32> to vector<1x8x8xf32>
    %58 = vector.shape_cast %57 : vector<1x8x8xf32> to vector<8x8xf32>
    %59 = arith.truncf %58 : vector<8x8xf32> to vector<8x8xbf16>
    %c0_16 = arith.constant 0 : index
    %c0_17 = arith.constant 0 : index
    %60 = vector.load %arg12[%c0_16, %c0_17] : memref<8x32xbf16, #tpu.memory_space<vmem>>, vector<8x8xbf16>
    tpu.vector_store %arg12[%c0_16, %c0_17], %59 {strides = array<i32>} : memref<8x32xbf16, #tpu.memory_space<vmem>>, vector<8x8xbf16>,
    %61 = vector.extract_strided_slice %56 {offsets = [1, 0, 0], sizes = [1, 8, 8], strides = [1, 1, 1]} : vector<4x8x8xf32> to vector<1x8x8xf32>
    %62 = vector.shape_cast %61 : vector<1x8x8xf32> to vector<8x8xf32>
    %63 = arith.truncf %62 : vector<8x8xf32> to vector<8x8xbf16>
    %c0_18 = arith.constant 0 : index
    %c8 = arith.constant 8 : index
    %64 = vector.load %arg12[%c0_18, %c8] : memref<8x32xbf16, #tpu.memory_space<vmem>>, vector<8x8xbf16>
    tpu.vector_store %arg12[%c0_18, %c8], %63 {strides = array<i32>} : memref<8x32xbf16, #tpu.memory_space<vmem>>, vector<8x8xbf16>,
    %65 = vector.extract_strided_slice %56 {offsets = [2, 0, 0], sizes = [1, 8, 8], strides = [1, 1, 1]} : vector<4x8x8xf32> to vector<1x8x8xf32>
    %66 = vector.shape_cast %65 : vector<1x8x8xf32> to vector<8x8xf32>
    %67 = arith.truncf %66 : vector<8x8xf32> to vector<8x8xbf16>
    %c0_19 = arith.constant 0 : index
    %c16 = arith.constant 16 : index
    %68 = vector.load %arg12[%c0_19, %c16] : memref<8x32xbf16, #tpu.memory_space<vmem>>, vector<8x8xbf16>
    tpu.vector_store %arg12[%c0_19, %c16], %67 {strides = array<i32>} : memref<8x32xbf16, #tpu.memory_space<vmem>>, vector<8x8xbf16>,
    %69 = vector.extract_strided_slice %56 {offsets = [3, 0, 0], sizes = [1, 8, 8], strides = [1, 1, 1]} : vector<4x8x8xf32> to vector<1x8x8xf32>
    %70 = vector.shape_cast %69 : vector<1x8x8xf32> to vector<8x8xf32>
    %71 = arith.truncf %70 : vector<8x8xf32> to vector<8x8xbf16>
    %c0_20 = arith.constant 0 : index
    %c24 = arith.constant 24 : index
    %72 = vector.load %arg12[%c0_20, %c24] : memref<8x32xbf16, #tpu.memory_space<vmem>>, vector<8x8xbf16>
    tpu.vector_store %arg12[%c0_20, %c24], %71 {strides = array<i32>} : memref<8x32xbf16, #tpu.memory_space<vmem>>, vector<8x8xbf16>,
    %c0_21 = arith.constant 0 : index
    %c0_22 = arith.constant 0 : index
    %73 = vector.load %arg12[%c0_21, %c0_22] : memref<8x32xbf16, #tpu.memory_space<vmem>>, vector<8x32xbf16>
    %c0_23 = arith.constant 0 : index
    %c0_24 = arith.constant 0 : index
    %c0_25 = arith.constant 0 : index
    %74 = vector.load %arg5[%c0_23, %c0_24, %c0_25] : memref<1x32x32xbf16, #tpu.memory_space<vmem>>, vector<1x32x32xbf16>
    %75 = vector.shape_cast %74 : vector<1x32x32xbf16> to vector<32x32xbf16>
    %cst_26 = arith.constant dense<0.000000e+00> : vector<8x32xf32>
    %76 = tpu.matmul %73, %75, %cst_26 {dimension_numbers = #tpu.dot_dimension_numbers<[1], [0], [0], [1], [0, 0, 1, 1], [], []>} : vector<8x32xbf16>, vector<32x32xbf16>, vector<8x32xf32> -> vector<8x32xf32>
    %77 = vector.extract_strided_slice %5 {offsets = [0, 0], sizes = [1, 32], strides = [1, 1]} : vector<6x32xf32> to vector<1x32xf32>
    %78 = vector.broadcast %77 : vector<1x32xf32> to vector<8x32xf32>
    %79 = arith.addf %76, %78 : vector<8x32xf32>
    %80 = arith.addf %3, %79 : vector<8x32xf32>
    %81 = vector.extract_strided_slice %5 {offsets = [2, 0], sizes = [1, 32], strides = [1, 1]} : vector<6x32xf32> to vector<1x32xf32>
    %82 = vector.extract_strided_slice %5 {offsets = [3, 0], sizes = [1, 32], strides = [1, 1]} : vector<6x32xf32> to vector<1x32xf32>
    %cst_27 = arith.constant dense<0.000000e+00> : vector<8xf32>
    %83 = vector.multi_reduction <add>, %80, %cst_27 [1] : vector<8x32xf32> to vector<8xf32>
    %84 = vector.shape_cast %83 : vector<8xf32> to vector<8x1xf32>
    %cst_28 = arith.constant 3.200000e+01 : f32
    %85 = vector.broadcast %cst_28 : f32 to vector<8x1xf32>
    %86 = arith.divf %84, %85 : vector<8x1xf32>
    %87 = vector.broadcast %86 : vector<8x1xf32> to vector<8x32xf32>
    %88 = arith.subf %80, %87 : vector<8x32xf32>
    %89 = arith.mulf %88, %88 : vector<8x32xf32>
    %cst_29 = arith.constant dense<0.000000e+00> : vector<8xf32>
    %90 = vector.multi_reduction <add>, %89, %cst_29 [1] : vector<8x32xf32> to vector<8xf32>
    %91 = vector.shape_cast %90 : vector<8xf32> to vector<8x1xf32>
    %cst_30 = arith.constant 3.200000e+01 : f32
    %92 = vector.broadcast %cst_30 : f32 to vector<8x1xf32>
    %93 = arith.divf %91, %92 : vector<8x1xf32>
    %94 = vector.broadcast %86 : vector<8x1xf32> to vector<8x32xf32>
    %95 = arith.subf %80, %94 : vector<8x32xf32>
    %cst_31 = arith.constant 9.99999974E-6 : f32
    %96 = vector.broadcast %cst_31 : f32 to vector<8x1xf32>
    %97 = arith.addf %93, %96 : vector<8x1xf32>
    %98 = math.rsqrt %97 : vector<8x1xf32>
    %99 = vector.broadcast %98 : vector<8x1xf32> to vector<8x32xf32>
    %100 = arith.mulf %95, %99 : vector<8x32xf32>
    %101 = vector.broadcast %81 : vector<1x32xf32> to vector<8x32xf32>
    %102 = arith.mulf %100, %101 : vector<8x32xf32>
    %103 = vector.broadcast %82 : vector<1x32xf32> to vector<8x32xf32>
    %104 = arith.addf %102, %103 : vector<8x32xf32>
    %105 = arith.truncf %104 : vector<8x32xf32> to vector<8x32xbf16>
    %c0_32 = arith.constant 0 : index
    %c0_33 = arith.constant 0 : index
    %c0_34 = arith.constant 0 : index
    %106 = vector.load %arg6[%c0_32, %c0_33, %c0_34] : memref<1x32x64xbf16, #tpu.memory_space<vmem>>, vector<1x32x64xbf16>
    %107 = vector.shape_cast %106 : vector<1x32x64xbf16> to vector<32x64xbf16>
    %cst_35 = arith.constant dense<0.000000e+00> : vector<8x64xf32>
    %108 = tpu.matmul %105, %107, %cst_35 {dimension_numbers = #tpu.dot_dimension_numbers<[1], [0], [0], [1], [0, 0, 1, 1], [], []>} : vector<8x32xbf16>, vector<32x64xbf16>, vector<8x64xf32> -> vector<8x64xf32>
    %c0_36 = arith.constant 0 : index
    %c0_37 = arith.constant 0 : index
    %c0_38 = arith.constant 0 : index
    %109 = vector.load %arg7[%c0_36, %c0_37, %c0_38] : memref<1x1x64xf32, #tpu.memory_space<vmem>>, vector<1x1x64xf32>
    %110 = vector.shape_cast %109 : vector<1x1x64xf32> to vector<1x64xf32>
    %111 = vector.broadcast %110 : vector<1x64xf32> to vector<8x64xf32>
    %112 = arith.addf %108, %111 : vector<8x64xf32>
    %cst_39 = arith.constant 0.000000e+00 : f32
    %113 = vector.broadcast %cst_39 : f32 to vector<8x64xf32>
    %114 = arith.maximumf %112, %113 : vector<8x64xf32>
    %115 = arith.truncf %114 : vector<8x64xf32> to vector<8x64xbf16>
    %c0_40 = arith.constant 0 : index
    %c0_41 = arith.constant 0 : index
    %c0_42 = arith.constant 0 : index
    %116 = vector.load %arg8[%c0_40, %c0_41, %c0_42] : memref<1x64x32xbf16, #tpu.memory_space<vmem>>, vector<1x64x32xbf16>
    %117 = vector.shape_cast %116 : vector<1x64x32xbf16> to vector<64x32xbf16>
    %cst_43 = arith.constant dense<0.000000e+00> : vector<8x32xf32>
    %118 = tpu.matmul %115, %117, %cst_43 {dimension_numbers = #tpu.dot_dimension_numbers<[1], [0], [0], [1], [0, 0, 1, 1], [], []>} : vector<8x64xbf16>, vector<64x32xbf16>, vector<8x32xf32> -> vector<8x32xf32>
    %119 = vector.extract_strided_slice %5 {offsets = [1, 0], sizes = [1, 32], strides = [1, 1]} : vector<6x32xf32> to vector<1x32xf32>
    %120 = vector.broadcast %119 : vector<1x32xf32> to vector<8x32xf32>
    %121 = arith.addf %118, %120 : vector<8x32xf32>
    %122 = arith.addf %104, %121 : vector<8x32xf32>
    %123 = vector.extract_strided_slice %5 {offsets = [4, 0], sizes = [1, 32], strides = [1, 1]} : vector<6x32xf32> to vector<1x32xf32>
    %124 = vector.extract_strided_slice %5 {offsets = [5, 0], sizes = [1, 32], strides = [1, 1]} : vector<6x32xf32> to vector<1x32xf32>
    %cst_44 = arith.constant dense<0.000000e+00> : vector<8xf32>
    %125 = vector.multi_reduction <add>, %122, %cst_44 [1] : vector<8x32xf32> to vector<8xf32>
    %126 = vector.shape_cast %125 : vector<8xf32> to vector<8x1xf32>
    %cst_45 = arith.constant 3.200000e+01 : f32
    %127 = vector.broadcast %cst_45 : f32 to vector<8x1xf32>
    %128 = arith.divf %126, %127 : vector<8x1xf32>
    %129 = vector.broadcast %128 : vector<8x1xf32> to vector<8x32xf32>
    %130 = arith.subf %122, %129 : vector<8x32xf32>
    %131 = arith.mulf %130, %130 : vector<8x32xf32>
    %cst_46 = arith.constant dense<0.000000e+00> : vector<8xf32>
    %132 = vector.multi_reduction <add>, %131, %cst_46 [1] : vector<8x32xf32> to vector<8xf32>
    %133 = vector.shape_cast %132 : vector<8xf32> to vector<8x1xf32>
    %cst_47 = arith.constant 3.200000e+01 : f32
    %134 = vector.broadcast %cst_47 : f32 to vector<8x1xf32>
    %135 = arith.divf %133, %134 : vector<8x1xf32>
    %136 = vector.broadcast %128 : vector<8x1xf32> to vector<8x32xf32>
    %137 = arith.subf %122, %136 : vector<8x32xf32>
    %cst_48 = arith.constant 9.99999974E-6 : f32
    %138 = vector.broadcast %cst_48 : f32 to vector<8x1xf32>
    %139 = arith.addf %135, %138 : vector<8x1xf32>
    %140 = math.rsqrt %139 : vector<8x1xf32>
    %141 = vector.broadcast %140 : vector<8x1xf32> to vector<8x32xf32>
    %142 = arith.mulf %137, %141 : vector<8x32xf32>
    %143 = vector.broadcast %123 : vector<1x32xf32> to vector<8x32xf32>
    %144 = arith.mulf %142, %143 : vector<8x32xf32>
    %145 = vector.broadcast %124 : vector<1x32xf32> to vector<8x32xf32>
    %146 = arith.addf %144, %145 : vector<8x32xf32>
    %c0_49 = arith.constant 0 : index
    %c0_50 = arith.constant 0 : index
    %147 = vector.load %arg11[%c0_49, %c0_50] : memref<8x32xf32, #tpu.memory_space<vmem>>, vector<8x32xf32>
    tpu.vector_store %arg11[%c0_49, %c0_50], %146 {strides = array<i32>} : memref<8x32xf32, #tpu.memory_space<vmem>>, vector<8x32xf32>,
    %c1_i32 = arith.constant 1 : i32
    %148 = arith.cmpi eq, %arg1, %c1_i32 : i32
    %149 = arith.extui %148 : i1 to i32
    %c0_i32_51 = arith.constant 0 : i32
    %150 = arith.cmpi ne, %149, %c0_i32_51 : i32
    scf.if %150 {
      %c0_52 = arith.constant 0 : index
      %c0_53 = arith.constant 0 : index
      %c0_54 = arith.constant 0 : index
      %151 = vector.load %arg10[%c0_52, %c0_53, %c0_54] : memref<1x8x32xf32, #tpu.memory_space<vmem>>, vector<1x8x32xf32>
      %152 = vector.shape_cast %151 : vector<1x8x32xf32> to vector<8x32xf32>
      %153 = vector.shape_cast %146 : vector<8x32xf32> to vector<1x8x32xf32>
      tpu.vector_store %arg10[%c0_52, %c0_53, %c0_54], %153 {strides = array<i32>} : memref<1x8x32xf32, #tpu.memory_space<vmem>>, vector<1x8x32xf32>,
    } else {
    }
    return
  }
  func.func @transform_0(%arg0: i32, %arg1: i32) -> (i32, i32, i32) {
    %c0_i32 = arith.constant 0 : i32
    %c0_i32_0 = arith.constant 0 : i32
    %c0_i32_1 = arith.constant 0 : i32
    return %arg0, %c0_i32, %c0_i32_0 : i32, i32, i32
  }
  func.func @transform_1(%arg0: i32, %arg1: i32) -> (i32, i32, i32) {
    %c0_i32 = arith.constant 0 : i32
    %c0_i32_0 = arith.constant 0 : i32
    %c0_i32_1 = arith.constant 0 : i32
    return %arg1, %c0_i32, %c0_i32_0 : i32, i32, i32
  }
  func.func @transform_2(%arg0: i32, %arg1: i32) -> (i32, i32, i32) {
    %c0_i32 = arith.constant 0 : i32
    %c0_i32_0 = arith.constant 0 : i32
    %c0_i32_1 = arith.constant 0 : i32
    return %arg1, %c0_i32, %c0_i32_0 : i32, i32, i32
  }
  func.func @transform_3(%arg0: i32, %arg1: i32) -> (i32, i32, i32) {
    %c0_i32 = arith.constant 0 : i32
    %c0_i32_0 = arith.constant 0 : i32
    %c0_i32_1 = arith.constant 0 : i32
    return %arg1, %c0_i32, %c0_i32_0 : i32, i32, i32
  }
  func.func @transform_4(%arg0: i32, %arg1: i32) -> (i32, i32, i32) {
    %c0_i32 = arith.constant 0 : i32
    %c0_i32_0 = arith.constant 0 : i32
    %c0_i32_1 = arith.constant 0 : i32
    return %arg1, %c0_i32, %c0_i32_0 : i32, i32, i32
  }
  func.func @transform_5(%arg0: i32, %arg1: i32) -> (i32, i32, i32) {
    %c0_i32 = arith.constant 0 : i32
    %c0_i32_0 = arith.constant 0 : i32
    %c0_i32_1 = arith.constant 0 : i32
    return %arg1, %c0_i32, %c0_i32_0 : i32, i32, i32
  }
  func.func @transform_6(%arg0: i32, %arg1: i32) -> (i32, i32, i32) {
    %c0_i32 = arith.constant 0 : i32
    %c0_i32_0 = arith.constant 0 : i32
    %c0_i32_1 = arith.constant 0 : i32
    return %arg1, %c0_i32, %c0_i32_0 : i32, i32, i32
  }
  func.func @transform_7(%arg0: i32, %arg1: i32) -> (i32, i32, i32) {
    %c0_i32 = arith.constant 0 : i32
    %c0_i32_0 = arith.constant 0 : i32
    %c0_i32_1 = arith.constant 0 : i32
    return %arg1, %c0_i32, %c0_i32_0 : i32, i32, i32
  }
  func.func @transform_8(%arg0: i32, %arg1: i32) -> (i32, i32, i32) {
    %c0_i32 = arith.constant 0 : i32
    %c0_i32_0 = arith.constant 0 : i32
    %c0_i32_1 = arith.constant 0 : i32
    return %arg0, %c0_i32, %c0_i32_0 : i32, i32, i32
  }
}

</mosaic_0001>

<llo_original>
// kernel: tpu_custom_call.1
$region0: #{tpu_custom_call.1}
  #allocation0 [shape = 'u32[]', space=smem, size = 0x4, offset = 0x4, fixed_abs, tag = 'smem constant byte address 0x4 - core index']
  #allocation1 [shape = 'u32[144,128]{1,0:T(1,128)}', space=vmem, size = 0x12000, scoped, tag = 'internal scratch']
  #allocation2 [shape = 'f32[8,32]{1,0:T(8,128)}', space=vmem, size = 0x1000, scoped, tag = 'scratch operand']
  #allocation3 [shape = 'bf16[8,32]{1,0:T(8,128)(2,1)}', space=vmem, size = 0x800, scoped, tag = 'scratch operand']
  %s0 = inlined_call_operand.vmem [shape: f32[2,8,32], index: 0, kind: input, shape index: {}]
  %s1 = inlined_call_operand.vmem [shape: bf16[2,32,96], index: 1, kind: input, shape index: {}]
  %s2 = inlined_call_operand.vmem [shape: f32[2,1,96], index: 2, kind: input, shape index: {}]
  %s3 = inlined_call_operand.vmem [shape: bf16[2,32,32], index: 3, kind: input, shape index: {}]
  %s4 = inlined_call_operand.vmem [shape: bf16[2,32,64], index: 4, kind: input, shape index: {}]
  %s5 = inlined_call_operand.hbm [shape: f32[2,1,64], index: 5, kind: input, shape index: {}]
  %s6 = inlined_call_operand.vmem [shape: bf16[2,64,32], index: 6, kind: input, shape index: {}]
  %s7 = inlined_call_operand.vmem [shape: f32[2,6,32], index: 7, kind: input, shape index: {}]
  %s8 = inlined_call_operand.hbm [shape: f32[2,8,32], index: 8, kind: output, shape index: {}]
  %s9 = sld [smem:[#allocation0]]
  $region77: #{tpu_custom_call.1} parent=0
    _
  %s11 = ssub.s32 1, %s9
  %s12 = scalar_select 0, %s11, %s9
  $region1: #{tpu_custom_call.1} parent=0
    #allocation4 [shape = 'u8[1024]{0}', space=vmem, size = 0x400, scoped, tag = 'input window, operand 5']
    #allocation5 [shape = 's32[2]{0}', space=sflag, size = 0x8, scoped, tag = 'scoped memory for tpu_custom_call.1']
    #allocation6 [shape = 's32[2]{0}', space=sflag, size = 0x8, scoped, tag = 'scoped memory for tpu_custom_call.1']
    #allocation7 [shape = 'u8[8192]{0}', space=vmem, size = 0x2000, scoped, tag = 'output window, operand 0']
    %13 = vsyncpa [#allocation5], 0
    %s14 = scalar_lea.sflag [#allocation5], 1
    %15 = vsyncpa %s14, 0
    %16 = vsyncpa [#allocation6], 0
    %s17 = scalar_lea.sflag [#allocation6], 1
    %18 = vsyncpa %s17, 0
    loop: start=0, step=1, limit=6
    $region2: #{tpu_custom_call.1} parent=1 // loop_pre_header
      _
    $region3: #{tpu_custom_call.1} parent=1 // loop_header
      %s20 = sphi 0, %s24
      %p21 = scmp.ge.s32.totalorder %s20, 6
      %s27 = sphi 0, %s39
      %s28 = sphi 0, %s35
      %s29 = sphi 0, %s27
      %s30 = sphi 0, %s28
      %s31 = sphi 0, %s29
      %s32 = sphi 0, %s30
      %s42 = sphi 0, %s44
      %s45 = sphi 0, %s42
      %s46 = sphi 0, %s45
      %s62 = sphi 0, %s46
      %s68 = sphi 0, %s70
      %s71 = sphi 0, %s68
      %s72 = sphi 0, %s71
      %s88 = sphi 0, %s72
      %s94 = sphi 0, %s96
      %s97 = sphi 0, %s94
      %s98 = sphi 0, %s97
      %s114 = sphi 0, %s98
      %s120 = sphi 0, %s122
      %s123 = sphi 0, %s120
      %s124 = sphi 0, %s123
      %s140 = sphi 0, %s124
      %s146 = sphi 0, %s148
      %s149 = sphi 0, %s146
      %s150 = sphi 0, %s149
      %s166 = sphi 0, %s150
      %s172 = sphi 0, %s174
      %s175 = sphi 0, %s172
      %s176 = sphi 0, %s175
      %s192 = sphi 0, %s176
      %s198 = sphi 0, %s200
      %s201 = sphi 0, %s198
      %s202 = sphi 0, %s201
      %s218 = sphi 0, %s202
      %s224 = sphi 0, %s226
      %s227 = sphi 0, %s224
      %s228 = sphi 0, %s227
      %s244 = sphi 0, %s228
      %s250 = sphi 0, %s252
      %s253 = sphi 0, %s250
      %s254 = sphi 0, %s253
      %s270 = sphi 0, %s254
    $region4: #{tpu_custom_call.1} parent=1 // loop_header_branch
      %23 = sbr.rel (%p21) target = $region8
    $region5: #{tpu_custom_call.1} parent=1 // loop_body
      %s25 = ssub.s32 %s20, 1
      %s26 = ssub.s32 %s20, 2
      %s33 = sadd.s32 1, %s28
      %p34 = scmp.ge.s32.totalorder %s33, 2
      %s35 = scalar_select %p34, 0, %s33
      %s36 = sadd.s32 1, %s27
      %s37 = scalar_select %p34, %s36, %s27
      %p38 = scmp.ge.s32.totalorder %s37, 2
      %s39 = scalar_select %p38, 0, %s37
      %s40 = ssub.s32 %s27, %s39
      %p41 = scmp.eq.s32.totalorder %s40, 0
      %s43 = sadd.s32 %s42, 1
      %s44 = scalar_select %p41, %s42, %s43
      %p47 = pneg %p41
      %p48 = scmp.eq.s32.totalorder %s20, 3
      %p49 = por %p47, %p48
      %p50 = scmp.ne.s32.totalorder %s42, %s45
      %p51 = scmp.eq.s32.totalorder %s20, 0
      %p52 = por %p50, %p51
      %p53 = scmp.ne.s32.totalorder %s42, %s45
      %p54 = scmp.eq.s32.totalorder %s25, 3
      %p55 = por %p53, %p54
      %p56 = scmp.ne.s32.totalorder %s45, %s46
      %p57 = scmp.eq.s32.totalorder %s25, 0
      %p58 = por %p56, %p57
      %p59 = scmp.ne.s32.totalorder %s45, %s46
      %p60 = scmp.eq.s32.totalorder %s26, 3
      %p61 = por %p59, %p60
      %p63 = scmp.ne.s32.totalorder %s46, %s62
      %p64 = scmp.eq.s32.totalorder %s26, 0
      %p65 = por %p63, %p64
      %s66 = ssub.s32 %s28, %s35
      %p67 = scmp.eq.s32.totalorder %s66, 0
      %s69 = sadd.s32 %s68, 1
      %s70 = scalar_select %p67, %s68, %s69
      %p73 = pneg %p67
      %p74 = scmp.eq.s32.totalorder %s20, 3
      %p75 = por %p73, %p74
      %p76 = scmp.ne.s32.totalorder %s68, %s71
      %p77 = scmp.eq.s32.totalorder %s20, 0
      %p78 = por %p76, %p77
      %p79 = scmp.ne.s32.totalorder %s68, %s71
      %p80 = scmp.eq.s32.totalorder %s25, 3
      %p81 = por %p79, %p80
      %p82 = scmp.ne.s32.totalorder %s71, %s72
      %p83 = scmp.eq.s32.totalorder %s25, 0
      %p84 = por %p82, %p83
      %p85 = scmp.ne.s32.totalorder %s71, %s72
      %p86 = scmp.eq.s32.totalorder %s26, 3
      %p87 = por %p85, %p86
      %p89 = scmp.ne.s32.totalorder %s72, %s88
      %p90 = scmp.eq.s32.totalorder %s26, 0
      %p91 = por %p89, %p90
      %s92 = ssub.s32 %s28, %s35
      %p93 = scmp.eq.s32.totalorder %s92, 0
      %s95 = sadd.s32 %s94, 1
      %s96 = scalar_select %p93, %s94, %s95
      %p99 = pneg %p93
      %p100 = scmp.eq.s32.totalorder %s20, 3
      %p101 = por %p99, %p100
      %p102 = scmp.ne.s32.totalorder %s94, %s97
      %p103 = scmp.eq.s32.totalorder %s20, 0
      %p104 = por %p102, %p103
      %p105 = scmp.ne.s32.totalorder %s94, %s97
      %p106 = scmp.eq.s32.totalorder %s25, 3
      %p107 = por %p105, %p106
      %p108 = scmp.ne.s32.totalorder %s97, %s98
      %p109 = scmp.eq.s32.totalorder %s25, 0
      %p110 = por %p108, %p109
      %p111 = scmp.ne.s32.totalorder %s97, %s98
      %p112 = scmp.eq.s32.totalorder %s26, 3
      %p113 = por %p111, %p112
      %p115 = scmp.ne.s32.totalorder %s98, %s114
      %p116 = scmp.eq.s32.totalorder %s26, 0
      %p117 = por %p115, %p116
      %s118 = ssub.s32 %s28, %s35
      %p119 = scmp.eq.s32.totalorder %s118, 0
      %s121 = sadd.s32 %s120, 1
      %s122 = scalar_select %p119, %s120, %s121
      %p125 = pneg %p119
      %p126 = scmp.eq.s32.totalorder %s20, 3
      %p127 = por %p125, %p126
      %p128 = scmp.ne.s32.totalorder %s120, %s123
      %p129 = scmp.eq.s32.totalorder %s20, 0
      %p130 = por %p128, %p129
      %p131 = scmp.ne.s32.totalorder %s120, %s123
      %p132 = scmp.eq.s32.totalorder %s25, 3
      %p133 = por %p131, %p132
      %p134 = scmp.ne.s32.totalorder %s123, %s124
      %p135 = scmp.eq.s32.totalorder %s25, 0
      %p136 = por %p134, %p135
      %p137 = scmp.ne.s32.totalorder %s123, %s124
      %p138 = scmp.eq.s32.totalorder %s26, 3
      %p139 = por %p137, %p138
      %p141 = scmp.ne.s32.totalorder %s124, %s140
      %p142 = scmp.eq.s32.totalorder %s26, 0
      %p143 = por %p141, %p142
      %s144 = ssub.s32 %s28, %s35
      %p145 = scmp.eq.s32.totalorder %s144, 0
      %s147 = sadd.s32 %s146, 1
      %s148 = scalar_select %p145, %s146, %s147
      %p151 = pneg %p145
      %p152 = scmp.eq.s32.totalorder %s20, 3
      %p153 = por %p151, %p152
      %p154 = scmp.ne.s32.totalorder %s146, %s149
      %p155 = scmp.eq.s32.totalorder %s20, 0
      %p156 = por %p154, %p155
      %p157 = scmp.ne.s32.totalorder %s146, %s149
      %p158 = scmp.eq.s32.totalorder %s25, 3
      %p159 = por %p157, %p158
      %p160 = scmp.ne.s32.totalorder %s149, %s150
      %p161 = scmp.eq.s32.totalorder %s25, 0
      %p162 = por %p160, %p161
      %p163 = scmp.ne.s32.totalorder %s149, %s150
      %p164 = scmp.eq.s32.totalorder %s26, 3
      %p165 = por %p163, %p164
      %p167 = scmp.ne.s32.totalorder %s150, %s166
      %p168 = scmp.eq.s32.totalorder %s26, 0
      %p169 = por %p167, %p168
      %s170 = ssub.s32 %s28, %s35
      %p171 = scmp.eq.s32.totalorder %s170, 0
      %s173 = sadd.s32 %s172, 1
      %s174 = scalar_select %p171, %s172, %s173
      %p177 = pneg %p171
      %p178 = scmp.eq.s32.totalorder %s20, 3
      %p179 = por %p177, %p178
      %p180 = scmp.ne.s32.totalorder %s172, %s175
      %p181 = scmp.eq.s32.totalorder %s20, 0
      %p182 = por %p180, %p181
      %p183 = scmp.ne.s32.totalorder %s172, %s175
      %p184 = scmp.eq.s32.totalorder %s25, 3
      %p185 = por %p183, %p184
      %p186 = scmp.ne.s32.totalorder %s175, %s176
      %p187 = scmp.eq.s32.totalorder %s25, 0
      %p188 = por %p186, %p187
      %p189 = scmp.ne.s32.totalorder %s175, %s176
      %p190 = scmp.eq.s32.totalorder %s26, 3
      %p191 = por %p189, %p190
      %p193 = scmp.ne.s32.totalorder %s176, %s192
      %p194 = scmp.eq.s32.totalorder %s26, 0
      %p195 = por %p193, %p194
      %s196 = ssub.s32 %s28, %s35
      %p197 = scmp.eq.s32.totalorder %s196, 0
      %s199 = sadd.s32 %s198, 1
      %s200 = scalar_select %p197, %s198, %s199
      %p203 = pneg %p197
      %p204 = scmp.eq.s32.totalorder %s20, 3
      %p205 = por %p203, %p204
      %p206 = scmp.ne.s32.totalorder %s198, %s201
      %p207 = scmp.eq.s32.totalorder %s20, 0
      %p208 = por %p206, %p207
      %p209 = scmp.ne.s32.totalorder %s198, %s201
      %p210 = scmp.eq.s32.totalorder %s25, 3
      %p211 = por %p209, %p210
      %p212 = scmp.ne.s32.totalorder %s201, %s202
      %p213 = scmp.eq.s32.totalorder %s25, 0
      %p214 = por %p212, %p213
      %p215 = scmp.ne.s32.totalorder %s201, %s202
      %p216 = scmp.eq.s32.totalorder %s26, 3
      %p217 = por %p215, %p216
      %p219 = scmp.ne.s32.totalorder %s202, %s218
      %p220 = scmp.eq.s32.totalorder %s26, 0
      %p221 = por %p219, %p220
      %s222 = ssub.s32 %s28, %s35
      %p223 = scmp.eq.s32.totalorder %s222, 0
      %s225 = sadd.s32 %s224, 1
      %s226 = scalar_select %p223, %s224, %s225
      %p229 = pneg %p223
      %p230 = scmp.eq.s32.totalorder %s20, 3
      %p231 = por %p229, %p230
      %p232 = scmp.ne.s32.totalorder %s224, %s227
      %p233 = scmp.eq.s32.totalorder %s20, 0
      %p234 = por %p232, %p233
      %p235 = scmp.ne.s32.totalorder %s224, %s227
      %p236 = scmp.eq.s32.totalorder %s25, 3
      %p237 = por %p235, %p236
      %p238 = scmp.ne.s32.totalorder %s227, %s228
      %p239 = scmp.eq.s32.totalorder %s25, 0
      %p240 = por %p238, %p239
      %p241 = scmp.ne.s32.totalorder %s227, %s228
      %p242 = scmp.eq.s32.totalorder %s26, 3
      %p243 = por %p241, %p242
      %p245 = scmp.ne.s32.totalorder %s228, %s244
      %p246 = scmp.eq.s32.totalorder %s26, 0
      %p247 = por %p245, %p246
      %s248 = ssub.s32 %s27, %s39
      %p249 = scmp.eq.s32.totalorder %s248, 0
      %s251 = sadd.s32 %s250, 1
      %s252 = scalar_select %p249, %s250, %s251
      %p255 = pneg %p249
      %p256 = scmp.eq.s32.totalorder %s20, 3
      %p257 = por %p255, %p256
      %p258 = scmp.ne.s32.totalorder %s250, %s253
      %p259 = scmp.eq.s32.totalorder %s20, 0
      %p260 = por %p258, %p259
      %p261 = scmp.ne.s32.totalorder %s250, %s253
      %p262 = scmp.eq.s32.totalorder %s25, 3
      %p263 = por %p261, %p262
      %p264 = scmp.ne.s32.totalorder %s253, %s254
      %p265 = scmp.eq.s32.totalorder %s25, 0
      %p266 = por %p264, %p265
      %p267 = scmp.ne.s32.totalorder %s253, %s254
      %p268 = scmp.eq.s32.totalorder %s26, 3
      %p269 = por %p267, %p268
      %p271 = scmp.ne.s32.totalorder %s254, %s270
      %p272 = scmp.eq.s32.totalorder %s26, 0
      %p273 = por %p271, %p272
      %p274 = scmp.le.s32.totalorder 1, %s20
      %p275 = scmp.lt.s32.totalorder %s20, 5
      %p276 = pnand %p274, %p275
      %p277 = pneg %p276
      // Predicated region
      $region9: #{tpu_custom_call.1} parent=5 // pred_check
        _
      $region10: #{tpu_custom_call.1} parent=5 // pred_check_branch
        %279 = sbr.rel (%p276) target = $region12
      $region11: #{tpu_custom_call.1} parent=5 // pred_region
        %s280 = ssub.s32 %s20, 1
      $region12: #{tpu_custom_call.1} parent=5 // pred_fallthru
        _
      %p281 = scmp.lt.s32.totalorder %s20, 4
      // Predicated region
      $region13: #{tpu_custom_call.1} parent=5 // pred_check
        %p282 = pneg %p281
      $region14: #{tpu_custom_call.1} parent=5 // pred_check_branch
        %284 = sbr.rel (%p282) target = $region16
      $region15: #{tpu_custom_call.1} parent=5 // pred_region
        // Predicated region
        $region17: #{tpu_custom_call.1} parent=15 // pred_check
          %p285 = pneg %p52
        $region18: #{tpu_custom_call.1} parent=15 // pred_check_branch
          %287 = sbr.rel (%p285) target = $region20
        $region19: #{tpu_custom_call.1} parent=15 // pred_region
          %p288 = scmp.lt.s32.totalorder %s27, 1
          %s289 = scalar_select %p288, %s27, 1
          %s290 = smul.addr %s289, 8
          %s291 = scalar_lea.vmem %s0, %s290
        $region20: #{tpu_custom_call.1} parent=15 // pred_fallthru
          _
        // Predicated region
        $region21: #{tpu_custom_call.1} parent=15 // pred_check
          %p292 = pneg %p78
        $region22: #{tpu_custom_call.1} parent=15 // pred_check_branch
          %294 = sbr.rel (%p292) target = $region24
        $region23: #{tpu_custom_call.1} parent=15 // pred_region
          %p295 = scmp.lt.s32.totalorder %s28, 1
          %s296 = scalar_select %p295, %s28, 1
          %s297 = smul.addr %s296, 4
          %s298 = smul.addr %s297, 4
          %s299 = scalar_lea.vmem %s1, %s298
        $region24: #{tpu_custom_call.1} parent=15 // pred_fallthru
          _
        // Predicated region
        $region25: #{tpu_custom_call.1} parent=15 // pred_check
          %p300 = pneg %p104
        $region26: #{tpu_custom_call.1} parent=15 // pred_check_branch
          %302 = sbr.rel (%p300) target = $region28
        $region27: #{tpu_custom_call.1} parent=15 // pred_region
          %p303 = scmp.lt.s32.totalorder %s28, 1
          %s304 = scalar_select %p303, %s28, 1
          %s305 = scalar_lea.vmem %s2, %s304
        $region28: #{tpu_custom_call.1} parent=15 // pred_fallthru
          _
        // Predicated region
        $region29: #{tpu_custom_call.1} parent=15 // pred_check
          %p306 = pneg %p130
        $region30: #{tpu_custom_call.1} parent=15 // pred_check_branch
          %308 = sbr.rel (%p306) target = $region32
        $region31: #{tpu_custom_call.1} parent=15 // pred_region
          %p309 = scmp.lt.s32.totalorder %s28, 1
          %s310 = scalar_select %p309, %s28, 1
          %s311 = smul.addr %s310, 4
          %s312 = smul.addr %s311, 4
          %s313 = scalar_lea.vmem %s3, %s312
        $region32: #{tpu_custom_call.1} parent=15 // pred_fallthru
          _
        // Predicated region
        $region33: #{tpu_custom_call.1} parent=15 // pred_check
          %p314 = pneg %p156
        $region34: #{tpu_custom_call.1} parent=15 // pred_check_branch
          %316 = sbr.rel (%p314) target = $region36
        $region35: #{tpu_custom_call.1} parent=15 // pred_region
          %p317 = scmp.lt.s32.totalorder %s28, 1
          %s318 = scalar_select %p317, %s28, 1
          %s319 = smul.addr %s318, 4
          %s320 = smul.addr %s319, 4
          %s321 = scalar_lea.vmem %s4, %s320
        $region36: #{tpu_custom_call.1} parent=15 // pred_fallthru
          _
        // Predicated region
        $region37: #{tpu_custom_call.1} parent=15 // pred_check
          %p322 = pneg %p182
        $region38: #{tpu_custom_call.1} parent=15 // pred_check_branch
          %324 = sbr.rel (%p322) target = $region40
        $region39: #{tpu_custom_call.1} parent=15 // pred_region
          %s325 = sand.u32 %s172, 1
          %s326 = scalar_lea.sflag [#allocation5], %s325
          %s327 = sand.u32 %s172, 1
          %s328 = scalar_lea.vmem [#allocation4], %s327
          %s330 = ssub.s32 16, 16
          %331 = vsyncadd %s326, %s330
          %s332 = smul.addr %s28, 16
          %s333 = scalar_lea.hbm %s5, %s332
          %s335 = sshll.u32 %s328, 4
          %s336 = int_to_ptr.vmem [resolvable:$true] %s335
          %338 = dma.hbm_to_vmem [thread:$0]  %s333, 16, %s336, %s326
        $region40: #{tpu_custom_call.1} parent=15 // pred_fallthru
          _
        // Predicated region
        $region41: #{tpu_custom_call.1} parent=15 // pred_check
          %p339 = pneg %p208
        $region42: #{tpu_custom_call.1} parent=15 // pred_check_branch
          %341 = sbr.rel (%p339) target = $region44
        $region43: #{tpu_custom_call.1} parent=15 // pred_region
          %p342 = scmp.lt.s32.totalorder %s28, 1
          %s343 = scalar_select %p342, %s28, 1
          %s344 = smul.addr %s343, 8
          %s345 = smul.addr %s344, 4
          %s346 = scalar_lea.vmem %s6, %s345
        $region44: #{tpu_custom_call.1} parent=15 // pred_fallthru
          _
        // Predicated region
        $region45: #{tpu_custom_call.1} parent=15 // pred_check
          %p347 = pneg %p234
        $region46: #{tpu_custom_call.1} parent=15 // pred_check_branch
          %349 = sbr.rel (%p347) target = $region48
        $region47: #{tpu_custom_call.1} parent=15 // pred_region
          %p350 = scmp.lt.s32.totalorder %s28, 1
          %s351 = scalar_select %p350, %s28, 1
          %s352 = smul.addr %s351, 8
          %s353 = scalar_lea.vmem %s7, %s352
        $region48: #{tpu_custom_call.1} parent=15 // pred_fallthru
          _
      $region16: #{tpu_custom_call.1} parent=5 // pred_fallthru
        _
      %p354 = scmp.le.s32.totalorder 1, %s20
      %p355 = scmp.lt.s32.totalorder %s20, 5
      %p356 = pnand %p354, %p355
      %p357 = pneg %p356
      // Predicated region
      $region49: #{tpu_custom_call.1} parent=5 // pred_check
        _
      $region50: #{tpu_custom_call.1} parent=5 // pred_check_branch
        %359 = sbr.rel (%p356) target = $region52
      $region51: #{tpu_custom_call.1} parent=5 // pred_region
        %s360 = ssub.s32 %s20, 1
        %s361 = sand.u32 %s175, 1
        %s362 = scalar_lea.sflag [#allocation5], %s361
        %s363 = sand.u32 %s175, 1
        %s364 = scalar_lea.vmem [#allocation4], %s363
        // Predicated region
        $region53: #{tpu_custom_call.1} parent=51 // pred_check
          %p365 = pneg %p188
        $region54: #{tpu_custom_call.1} parent=51 // pred_check_branch
          %367 = sbr.rel (%p365) target = $region56
        $region55: #{tpu_custom_call.1} parent=51 // pred_region
          %368 = dma.done %s362, 16
        $region56: #{tpu_custom_call.1} parent=51 // pred_fallthru
          _
        %p369 = scmp.lt.s32.totalorder %s29, 1
        %s370 = scalar_select %p369, %s29, 1
        %s371 = smul.addr %s370, 8
        %s372 = scalar_lea.vmem %s0, %s371
        %p373 = pneg %p58
        %p374 = pneg %p55
        %p375 = scmp.lt.s32.totalorder %s30, 1
        %s376 = scalar_select %p375, %s30, 1
        %s377 = smul.addr %s376, 4
        %s378 = smul.addr %s377, 4
        %s379 = scalar_lea.vmem %s1, %s378
        %p380 = pneg %p84
        %p381 = pneg %p81
        %p382 = scmp.lt.s32.totalorder %s30, 1
        %s383 = scalar_select %p382, %s30, 1
        %s384 = scalar_lea.vmem %s2, %s383
        %p385 = pneg %p110
        %p386 = pneg %p107
        %p387 = scmp.lt.s32.totalorder %s30, 1
        %s388 = scalar_select %p387, %s30, 1
        %s389 = smul.addr %s388, 4
        %s390 = smul.addr %s389, 4
        %s391 = scalar_lea.vmem %s3, %s390
        %p392 = pneg %p136
        %p393 = pneg %p133
        %p394 = scmp.lt.s32.totalorder %s30, 1
        %s395 = scalar_select %p394, %s30, 1
        %s396 = smul.addr %s395, 4
        %s397 = smul.addr %s396, 4
        %s398 = scalar_lea.vmem %s4, %s397
        %p399 = pneg %p162
        %p400 = pneg %p159
        %s401 = sand.u32 %s175, 1
        %s402 = scalar_lea.sflag [#allocation5], %s401
        %s403 = sand.u32 %s175, 1
        %s404 = scalar_lea.vmem [#allocation4], %s403
        %p405 = pneg %p188
        %p406 = pneg %p185
        %p407 = scmp.lt.s32.totalorder %s30, 1
        %s408 = scalar_select %p407, %s30, 1
        %s409 = smul.addr %s408, 8
        %s410 = smul.addr %s409, 4
        %s411 = scalar_lea.vmem %s6, %s410
        %p412 = pneg %p214
        %p413 = pneg %p211
        %p414 = scmp.lt.s32.totalorder %s30, 1
        %s415 = scalar_select %p414, %s30, 1
        %s416 = smul.addr %s415, 8
        %s417 = scalar_lea.vmem %s7, %s416
        %p418 = pneg %p240
        %p419 = pneg %p237
        %p420 = pneg %p266
        %p421 = pneg %p263
        %s422 = sand.u32 %s253, 1
        %s423 = scalar_lea.sflag [#allocation6], %s422
        %s424 = sand.u32 %s253, 1
        %s425 = smul.addr %s424, 8
        %s426 = scalar_lea.vmem [#allocation7], %s425
        %p427 = scmp.lt.s32.totalorder %s29, 1
        %s428 = scalar_select %p427, %s29, 1
        %s429 = smul.addr %s428, 8
        %s430 = scalar_lea.vmem %s0, %s429
        %p431 = scmp.lt.s32.totalorder %s30, 1
        %s432 = scalar_select %p431, %s30, 1
        %s433 = smul.addr %s432, 4
        %s434 = smul.addr %s433, 4
        %s435 = scalar_lea.vmem %s1, %s434
        %p436 = scmp.lt.s32.totalorder %s30, 1
        %s437 = scalar_select %p436, %s30, 1
        %s438 = scalar_lea.vmem %s2, %s437
        %p439 = scmp.lt.s32.totalorder %s30, 1
        %s440 = scalar_select %p439, %s30, 1
        %s441 = smul.addr %s440, 4
        %s442 = smul.addr %s441, 4
        %s443 = scalar_lea.vmem %s3, %s442
        %p444 = scmp.lt.s32.totalorder %s30, 1
        %s445 = scalar_select %p444, %s30, 1
        %s446 = smul.addr %s445, 4
        %s447 = smul.addr %s446, 4
        %s448 = scalar_lea.vmem %s4, %s447
        %p449 = scmp.lt.s32.totalorder %s30, 1
        %s450 = scalar_select %p449, %s30, 1
        %s451 = smul.addr %s450, 8
        %s452 = smul.addr %s451, 4
        %s453 = scalar_lea.vmem %s6, %s452
        %p454 = scmp.lt.s32.totalorder %s30, 1
        %s455 = scalar_select %p454, %s30, 1
        %s456 = smul.addr %s455, 8
        %s457 = scalar_lea.vmem %s7, %s456
        %p459 = scmp.eq.s32.totalorder %s30, 0
        // Predicated region
        $region57: #{tpu_custom_call.1} parent=51 // pred_check
          %p460 = pneg %p459
        $region58: #{tpu_custom_call.1} parent=51 // pred_check_branch
          %462 = sbr.rel (%p460) target = $region60
        $region59: #{tpu_custom_call.1} parent=51 // pred_region
          %v463 = vld [vmem:[%s430] sm:$0xff]
          %vm464 = vcmask 261120
          %465 = vst.msk [vmem:[#allocation2] sm:$0xff] %vm464, %v463
        $region60: #{tpu_custom_call.1} parent=51 // pred_fallthru
          _
        %v466 = vld [vmem:[#allocation2] sm:$0xff]
        %v467 = vld [vmem:[%s457] sm:$0x3f]
        %v468 = vpack.c.bf16 %v466, %v466
        %v469 = vld [vmem:[%s435] sm:$0xf]
        %v470 = vld [vmem:[%s435 + $0x4] sm:$0xf]
        %v471 = vld [vmem:[%s435 + $0x8] sm:$0xf]
        %v472 = vld [vmem:[%s435 + $0xc] sm:$0xf]
        %v473 = vld [vmem:[%s438] sm:$0x1]
        %v475 = vlaneseq
        %v476 = vshrl.u32 %v475, 7
        %v477 = vsub.s32 0, %v476
        %v478 = vrot.slane %v473, %v477
        %v484 = vunpack.c.l.b16 %v469
        %v485 = vunpack.c.l.b16 %v470
        %v486 = vunpack.c.l.b16 %v471
        %v487 = vunpack.c.l.b16 %v472
        %v488 = vpack.c.b16 %v485, %v484
        %v489 = vpack.c.b16 %v487, %v486
        %vm492 = vcmask 261120
        %v494 = vsel %vm492, %v468, 0
        %496 = vmatprep.subr.bf16.mxu0 0
        %497 = vmatpush1.bf16.msra.mxu0 %v488
        %498 = vmatprep.subr.bf16.mxu0 0
        %499 = vmatpush1.bf16.msra.mxu0 %v489
        %500 = vmatprep.subr.bf16.mxu0 0
        %501 = vmatpush1.bf16.msra.mxu0 0
        %502 = vmatprep.subr.bf16.mxu0 0
        %503 = vmatpush1.bf16.msra.mxu0 0
        %504 = vmatprep.subr.bf16.mxu0 0
        %505 = vmatpush1.bf16.msra.mxu0 0
        %506 = vmatprep.subr.bf16.mxu0 0
        %507 = vmatpush1.bf16.msra.mxu0 0
        %508 = vmatprep.subr.bf16.mxu0 0
        %509 = vmatpush1.bf16.msra.mxu0 0
        %510 = vmatprep.subr.bf16.mxu0 0
        %511 = vmatpush1.bf16.msra.mxu0 0
        %512 = vmatprep.subr.bf16.mxu0 0
        %513 = vmatpush1.bf16.msra.mxu0 0
        %514 = vmatprep.subr.bf16.mxu0 0
        %515 = vmatpush1.bf16.msra.mxu0 0
        %516 = vmatprep.subr.bf16.mxu0 0
        %517 = vmatpush1.bf16.msra.mxu0 0
        %518 = vmatprep.subr.bf16.mxu0 0
        %519 = vmatpush1.bf16.msra.mxu0 0
        %520 = vmatprep.subr.bf16.mxu0 0
        %521 = vmatpush1.bf16.msra.mxu0 0
        %522 = vmatprep.subr.bf16.mxu0 0
        %523 = vmatpush1.bf16.msra.mxu0 0
        %524 = vmatprep.subr.bf16.mxu0 0
        %525 = vmatpush1.bf16.msra.mxu0 0
        %526 = vmatprep.subr.bf16.mxu0 0
        %527 = vmatpush1.bf16.msra.mxu0 0
        %528 = vmatprep.mubr.bf16.mxu0 0
        %529 = vmatmul.mubr.bf16.gmra.mrb[0].mxu0 %v494
        %v530 = vpop.f32.mrb[0].mxu0
        %v531 = vadd.f32 %v478, %v530
        %v532 = vpop.f32.mrb[0].mxu0
        %v533 = vpop.f32.mrb[0].mxu0
        %v534 = vpop.f32.mrb[0].mxu0
        %535 = vdwg.mxu0
        %v536 = vpack.c.bf16 %v531, %v531
        %538 = vrot.lane.b32.xlu0 %v536, 120
        %v539 = vpop.permute.xlu0 %538
        %540 = vrot.lane.b32.xlu0 %v536, 112
        %v541 = vpop.permute.xlu0 %540
        %542 = vrot.lane.b32.xlu0 %v536, 104
        %v543 = vpop.permute.xlu0 %542
        %544 = vrot.lane.b32.xlu0 %v536, 96
        %v545 = vpop.permute.xlu0 %544
        %vm546 = vcmask 64512
        %v548 = vsel %vm546, %v536, 0
        %v551 = vsel %vm546, %v545, 0
        %553 = vmatprep.subr.bf16.mxu0 0
        %554 = vmatpush1.bf16.xpose.msra.mxu0 %v551
        %555 = vmatprep.subr.bf16.mxu0 0
        %556 = vmatpush1.bf16.xpose.msra.mxu0 0
        %557 = vmatprep.subr.bf16.mxu0 0
        %558 = vmatpush1.bf16.xpose.msra.mxu0 0
        %559 = vmatprep.subr.bf16.mxu0 0
        %560 = vmatpush1.bf16.xpose.msra.mxu0 0
        %561 = vmatprep.subr.bf16.mxu0 0
        %562 = vmatpush1.bf16.xpose.msra.mxu0 0
        %563 = vmatprep.subr.bf16.mxu0 0
        %564 = vmatpush1.bf16.xpose.msra.mxu0 0
        %565 = vmatprep.subr.bf16.mxu0 0
        %566 = vmatpush1.bf16.xpose.msra.mxu0 0
        %567 = vmatprep.subr.bf16.mxu0 0
        %568 = vmatpush1.bf16.xpose.msra.mxu0 0
        %569 = vmatprep.subr.bf16.mxu0 0
        %570 = vmatpush1.bf16.xpose.msra.mxu0 0
        %571 = vmatprep.subr.bf16.mxu0 0
        %572 = vmatpush1.bf16.xpose.msra.mxu0 0
        %573 = vmatprep.subr.bf16.mxu0 0
        %574 = vmatpush1.bf16.xpose.msra.mxu0 0
        %575 = vmatprep.subr.bf16.mxu0 0
        %576 = vmatpush1.bf16.xpose.msra.mxu0 0
        %577 = vmatprep.subr.bf16.mxu0 0
        %578 = vmatpush1.bf16.xpose.msra.mxu0 0
        %579 = vmatprep.subr.bf16.mxu0 0
        %580 = vmatpush1.bf16.xpose.msra.mxu0 0
        %581 = vmatprep.subr.bf16.mxu0 0
        %582 = vmatpush1.bf16.xpose.msra.mxu0 0
        %583 = vmatprep.subr.bf16.mxu0 0
        %584 = vmatpush1.bf16.xpose.msra.mxu0 0
        %585 = vmatprep.mubr.bf16.mxu0 0
        %586 = vmatmul.mubr.bf16.gmra.mrb[0].mxu0 %v548
        %v587 = vpop.f32.mrb[0].mxu0
        %v588 = vadd.f32 0.0, %v587
        %v589 = vpop.f32.mrb[0].mxu0
        %v590 = vpop.f32.mrb[0].mxu0
        %v591 = vpop.f32.mrb[0].mxu0
        %592 = vdwg.mxu0
        %593 = vrot.lane.b32.xlu0 %v539, 96
        %v594 = vpop.permute.xlu0 %593
        %v596 = vsel %vm546, %v539, 0
        %v599 = vsel %vm546, %v594, 0
        %601 = vmatprep.subr.bf16.mxu0 0
        %602 = vmatpush1.bf16.xpose.msra.mxu0 %v599
        %603 = vmatprep.subr.bf16.mxu0 0
        %604 = vmatpush1.bf16.xpose.msra.mxu0 0
        %605 = vmatprep.subr.bf16.mxu0 0
        %606 = vmatpush1.bf16.xpose.msra.mxu0 0
        %607 = vmatprep.subr.bf16.mxu0 0
        %608 = vmatpush1.bf16.xpose.msra.mxu0 0
        %609 = vmatprep.subr.bf16.mxu0 0
        %610 = vmatpush1.bf16.xpose.msra.mxu0 0
        %611 = vmatprep.subr.bf16.mxu0 0
        %612 = vmatpush1.bf16.xpose.msra.mxu0 0
        %613 = vmatprep.subr.bf16.mxu0 0
        %614 = vmatpush1.bf16.xpose.msra.mxu0 0
        %615 = vmatprep.subr.bf16.mxu0 0
        %616 = vmatpush1.bf16.xpose.msra.mxu0 0
        %617 = vmatprep.subr.bf16.mxu0 0
        %618 = vmatpush1.bf16.xpose.msra.mxu0 0
        %619 = vmatprep.subr.bf16.mxu0 0
        %620 = vmatpush1.bf16.xpose.msra.mxu0 0
        %621 = vmatprep.subr.bf16.mxu0 0
        %622 = vmatpush1.bf16.xpose.msra.mxu0 0
        %623 = vmatprep.subr.bf16.mxu0 0
        %624 = vmatpush1.bf16.xpose.msra.mxu0 0
        %625 = vmatprep.subr.bf16.mxu0 0
        %626 = vmatpush1.bf16.xpose.msra.mxu0 0
        %627 = vmatprep.subr.bf16.mxu0 0
        %628 = vmatpush1.bf16.xpose.msra.mxu0 0
        %629 = vmatprep.subr.bf16.mxu0 0
        %630 = vmatpush1.bf16.xpose.msra.mxu0 0
        %631 = vmatprep.subr.bf16.mxu0 0
        %632 = vmatpush1.bf16.xpose.msra.mxu0 0
        %633 = vmatprep.mubr.bf16.mxu0 0
        %634 = vmatmul.mubr.bf16.gmra.mrb[0].mxu0 %v596
        %v635 = vpop.f32.mrb[0].mxu0
        %v636 = vadd.f32 0.0, %v635
        %v637 = vpop.f32.mrb[0].mxu0
        %v638 = vpop.f32.mrb[0].mxu0
        %v639 = vpop.f32.mrb[0].mxu0
        %640 = vdwg.mxu0
        %641 = vrot.lane.b32.xlu0 %v541, 96
        %v642 = vpop.permute.xlu0 %641
        %v644 = vsel %vm546, %v541, 0
        %v647 = vsel %vm546, %v642, 0
        %649 = vmatprep.subr.bf16.mxu0 0
        %650 = vmatpush1.bf16.xpose.msra.mxu0 %v647
        %651 = vmatprep.subr.bf16.mxu0 0
        %652 = vmatpush1.bf16.xpose.msra.mxu0 0
        %653 = vmatprep.subr.bf16.mxu0 0
        %654 = vmatpush1.bf16.xpose.msra.mxu0 0
        %655 = vmatprep.subr.bf16.mxu0 0
        %656 = vmatpush1.bf16.xpose.msra.mxu0 0
        %657 = vmatprep.subr.bf16.mxu0 0
        %658 = vmatpush1.bf16.xpose.msra.mxu0 0
        %659 = vmatprep.subr.bf16.mxu0 0
        %660 = vmatpush1.bf16.xpose.msra.mxu0 0
        %661 = vmatprep.subr.bf16.mxu0 0
        %662 = vmatpush1.bf16.xpose.msra.mxu0 0
        %663 = vmatprep.subr.bf16.mxu0 0
        %664 = vmatpush1.bf16.xpose.msra.mxu0 0
        %665 = vmatprep.subr.bf16.mxu0 0
        %666 = vmatpush1.bf16.xpose.msra.mxu0 0
        %667 = vmatprep.subr.bf16.mxu0 0
        %668 = vmatpush1.bf16.xpose.msra.mxu0 0
        %669 = vmatprep.subr.bf16.mxu0 0
        %670 = vmatpush1.bf16.xpose.msra.mxu0 0
        %671 = vmatprep.subr.bf16.mxu0 0
        %672 = vmatpush1.bf16.xpose.msra.mxu0 0
        %673 = vmatprep.subr.bf16.mxu0 0
        %674 = vmatpush1.bf16.xpose.msra.mxu0 0
        %675 = vmatprep.subr.bf16.mxu0 0
        %676 = vmatpush1.bf16.xpose.msra.mxu0 0
        %677 = vmatprep.subr.bf16.mxu0 0
        %678 = vmatpush1.bf16.xpose.msra.mxu0 0
        %679 = vmatprep.subr.bf16.mxu0 0
        %680 = vmatpush1.bf16.xpose.msra.mxu0 0
        %681 = vmatprep.mubr.bf16.mxu0 0
        %682 = vmatmul.mubr.bf16.gmra.mrb[0].mxu0 %v644
        %v683 = vpop.f32.mrb[0].mxu0
        %v684 = vadd.f32 0.0, %v683
        %v685 = vpop.f32.mrb[0].mxu0
        %v686 = vpop.f32.mrb[0].mxu0
        %v687 = vpop.f32.mrb[0].mxu0
        %688 = vdwg.mxu0
        %689 = vrot.lane.b32.xlu0 %v543, 96
        %v690 = vpop.permute.xlu0 %689
        %v692 = vsel %vm546, %v543, 0
        %v695 = vsel %vm546, %v690, 0
        %697 = vmatprep.subr.bf16.mxu0 0
        %698 = vmatpush1.bf16.xpose.msra.mxu0 %v695
        %699 = vmatprep.subr.bf16.mxu0 0
        %700 = vmatpush1.bf16.xpose.msra.mxu0 0
        %701 = vmatprep.subr.bf16.mxu0 0
        %702 = vmatpush1.bf16.xpose.msra.mxu0 0
        %703 = vmatprep.subr.bf16.mxu0 0
        %704 = vmatpush1.bf16.xpose.msra.mxu0 0
        %705 = vmatprep.subr.bf16.mxu0 0
        %706 = vmatpush1.bf16.xpose.msra.mxu0 0
        %707 = vmatprep.subr.bf16.mxu0 0
        %708 = vmatpush1.bf16.xpose.msra.mxu0 0
        %709 = vmatprep.subr.bf16.mxu0 0
        %710 = vmatpush1.bf16.xpose.msra.mxu0 0
        %711 = vmatprep.subr.bf16.mxu0 0
        %712 = vmatpush1.bf16.xpose.msra.mxu0 0
        %713 = vmatprep.subr.bf16.mxu0 0
        %714 = vmatpush1.bf16.xpose.msra.mxu0 0
        %715 = vmatprep.subr.bf16.mxu0 0
        %716 = vmatpush1.bf16.xpose.msra.mxu0 0
        %717 = vmatprep.subr.bf16.mxu0 0
        %718 = vmatpush1.bf16.xpose.msra.mxu0 0
        %719 = vmatprep.subr.bf16.mxu0 0
        %720 = vmatpush1.bf16.xpose.msra.mxu0 0
        %721 = vmatprep.subr.bf16.mxu0 0
        %722 = vmatpush1.bf16.xpose.msra.mxu0 0
        %723 = vmatprep.subr.bf16.mxu0 0
        %724 = vmatpush1.bf16.xpose.msra.mxu0 0
        %725 = vmatprep.subr.bf16.mxu0 0
        %726 = vmatpush1.bf16.xpose.msra.mxu0 0
        %727 = vmatprep.subr.bf16.mxu0 0
        %728 = vmatpush1.bf16.xpose.msra.mxu0 0
        %729 = vmatprep.mubr.bf16.mxu0 0
        %730 = vmatmul.mubr.bf16.gmra.mrb[0].mxu0 %v692
        %v731 = vpop.f32.mrb[0].mxu0
        %v732 = vadd.f32 0.0, %v731
        %v733 = vpop.f32.mrb[0].mxu0
        %v734 = vpop.f32.mrb[0].mxu0
        %v735 = vpop.f32.mrb[0].mxu0
        %736 = vdwg.mxu0
        %v737 = vmul.f32 %v588, 0.35355338
        %v738 = vmul.f32 %v636, 0.35355338
        %v739 = vmul.f32 %v684, 0.35355338
        %v740 = vmul.f32 %v732, 0.35355338
        %v741 = vsel %vm546, %v737, -inf
        %742 = vmax.xlane.f32.xlu0 %v741
        %v743 = vpop.xlane.xlu0 %742
        %v744 = vsel %vm546, %v738, -inf
        %745 = vmax.xlane.f32.xlu0 %v744
        %v746 = vpop.xlane.xlu0 %745
        %v747 = vsel %vm546, %v739, -inf
        %748 = vmax.xlane.f32.xlu0 %v747
        %v749 = vpop.xlane.xlu0 %748
        %v750 = vsel %vm546, %v740, -inf
        %751 = vmax.xlane.f32.xlu0 %v750
        %v752 = vpop.xlane.xlu0 %751
        %v753 = vsub.f32 %v737, %v743
        %v754 = vsub.f32 %v738, %v746
        %v755 = vsub.f32 %v739, %v749
        %v756 = vsub.f32 %v740, %v752
        %v757 = vmul.f32 %v753, 1.442695
        %v758 = vpow.pop %v757
        %v759 = vmul.f32 %v754, 1.442695
        %v760 = vpow.pop %v759
        %v761 = vmul.f32 %v755, 1.442695
        %v762 = vpow.pop %v761
        %v763 = vmul.f32 %v756, 1.442695
        %v764 = vpow.pop %v763
        %v765 = vsel %vm546, %v758, 0.0
        %766 = vadd.xlane.f32.xlu0 %v765
        %v767 = vpop.xlane.xlu0 %766
        %v768 = vsel %vm546, %v760, 0.0
        %769 = vadd.xlane.f32.xlu0 %v768
        %v770 = vpop.xlane.xlu0 %769
        %v771 = vsel %vm546, %v762, 0.0
        %772 = vadd.xlane.f32.xlu0 %v771
        %v773 = vpop.xlane.xlu0 %772
        %v774 = vsel %vm546, %v764, 0.0
        %775 = vadd.xlane.f32.xlu0 %v774
        %v776 = vpop.xlane.xlu0 %775
        %v777 = vrcp.pop %v767
        %v778 = vrcp.pop %v770
        %v779 = vrcp.pop %v773
        %v780 = vrcp.pop %v776
        %v781 = vmul.f32 %v758, %v777
        %v782 = vmul.f32 %v760, %v778
        %v783 = vmul.f32 %v762, %v779
        %v784 = vmul.f32 %v764, %v780
        %v785 = vpack.c.bf16 %v781, %v781
        %v786 = vpack.c.bf16 %v782, %v782
        %v787 = vpack.c.bf16 %v783, %v783
        %v788 = vpack.c.bf16 %v784, %v784
        %789 = vrot.lane.b32.xlu0 %v536, 64
        %v790 = vpop.permute.xlu0 %789
        %v792 = vsel %vm546, %v785, 0
        %vm794 = vcmask 1043456
        %v796 = vsel %vm794, %v790, 0
        %798 = vmatprep.subr.bf16.mxu0 0
        %799 = vmatpush1.bf16.msra.mxu0 %v796
        %800 = vmatprep.subr.bf16.mxu0 0
        %801 = vmatpush1.bf16.msra.mxu0 0
        %802 = vmatprep.subr.bf16.mxu0 0
        %803 = vmatpush1.bf16.msra.mxu0 0
        %804 = vmatprep.subr.bf16.mxu0 0
        %805 = vmatpush1.bf16.msra.mxu0 0
        %806 = vmatprep.subr.bf16.mxu0 0
        %807 = vmatpush1.bf16.msra.mxu0 0
        %808 = vmatprep.subr.bf16.mxu0 0
        %809 = vmatpush1.bf16.msra.mxu0 0
        %810 = vmatprep.subr.bf16.mxu0 0
        %811 = vmatpush1.bf16.msra.mxu0 0
        %812 = vmatprep.subr.bf16.mxu0 0
        %813 = vmatpush1.bf16.msra.mxu0 0
        %814 = vmatprep.subr.bf16.mxu0 0
        %815 = vmatpush1.bf16.msra.mxu0 0
        %816 = vmatprep.subr.bf16.mxu0 0
        %817 = vmatpush1.bf16.msra.mxu0 0
        %818 = vmatprep.subr.bf16.mxu0 0
        %819 = vmatpush1.bf16.msra.mxu0 0
        %820 = vmatprep.subr.bf16.mxu0 0
        %821 = vmatpush1.bf16.msra.mxu0 0
        %822 = vmatprep.subr.bf16.mxu0 0
        %823 = vmatpush1.bf16.msra.mxu0 0
        %824 = vmatprep.subr.bf16.mxu0 0
        %825 = vmatpush1.bf16.msra.mxu0 0
        %826 = vmatprep.subr.bf16.mxu0 0
        %827 = vmatpush1.bf16.msra.mxu0 0
        %828 = vmatprep.subr.bf16.mxu0 0
        %829 = vmatpush1.bf16.msra.mxu0 0
        %830 = vmatprep.mubr.bf16.mxu0 0
        %831 = vmatmul.mubr.bf16.gmra.mrb[0].mxu0 %v792
        %v832 = vpop.f32.mrb[0].mxu0
        %v833 = vadd.f32 0.0, %v832
        %v834 = vpop.f32.mrb[0].mxu0
        %v835 = vpop.f32.mrb[0].mxu0
        %v836 = vpop.f32.mrb[0].mxu0
        %837 = vdwg.mxu0
        %838 = vrot.lane.b32.xlu0 %v539, 64
        %v839 = vpop.permute.xlu0 %838
        %v841 = vsel %vm546, %v786, 0
        %v844 = vsel %vm794, %v839, 0
        %846 = vmatprep.subr.bf16.mxu0 0
        %847 = vmatpush1.bf16.msra.mxu0 %v844
        %848 = vmatprep.subr.bf16.mxu0 0
        %849 = vmatpush1.bf16.msra.mxu0 0
        %850 = vmatprep.subr.bf16.mxu0 0
        %851 = vmatpush1.bf16.msra.mxu0 0
        %852 = vmatprep.subr.bf16.mxu0 0
        %853 = vmatpush1.bf16.msra.mxu0 0
        %854 = vmatprep.subr.bf16.mxu0 0
        %855 = vmatpush1.bf16.msra.mxu0 0
        %856 = vmatprep.subr.bf16.mxu0 0
        %857 = vmatpush1.bf16.msra.mxu0 0
        %858 = vmatprep.subr.bf16.mxu0 0
        %859 = vmatpush1.bf16.msra.mxu0 0
        %860 = vmatprep.subr.bf16.mxu0 0
        %861 = vmatpush1.bf16.msra.mxu0 0
        %862 = vmatprep.subr.bf16.mxu0 0
        %863 = vmatpush1.bf16.msra.mxu0 0
        %864 = vmatprep.subr.bf16.mxu0 0
        %865 = vmatpush1.bf16.msra.mxu0 0
        %866 = vmatprep.subr.bf16.mxu0 0
        %867 = vmatpush1.bf16.msra.mxu0 0
        %868 = vmatprep.subr.bf16.mxu0 0
        %869 = vmatpush1.bf16.msra.mxu0 0
        %870 = vmatprep.subr.bf16.mxu0 0
        %871 = vmatpush1.bf16.msra.mxu0 0
        %872 = vmatprep.subr.bf16.mxu0 0
        %873 = vmatpush1.bf16.msra.mxu0 0
        %874 = vmatprep.subr.bf16.mxu0 0
        %875 = vmatpush1.bf16.msra.mxu0 0
        %876 = vmatprep.subr.bf16.mxu0 0
        %877 = vmatpush1.bf16.msra.mxu0 0
        %878 = vmatprep.mubr.bf16.mxu0 0
        %879 = vmatmul.mubr.bf16.gmra.mrb[0].mxu0 %v841
        %v880 = vpop.f32.mrb[0].mxu0
        %v881 = vadd.f32 0.0, %v880
        %v882 = vpop.f32.mrb[0].mxu0
        %v883 = vpop.f32.mrb[0].mxu0
        %v884 = vpop.f32.mrb[0].mxu0
        %885 = vdwg.mxu0
        %886 = vrot.lane.b32.xlu0 %v541, 64
        %v887 = vpop.permute.xlu0 %886
        %v889 = vsel %vm546, %v787, 0
        %v892 = vsel %vm794, %v887, 0
        %894 = vmatprep.subr.bf16.mxu0 0
        %895 = vmatpush1.bf16.msra.mxu0 %v892
        %896 = vmatprep.subr.bf16.mxu0 0
        %897 = vmatpush1.bf16.msra.mxu0 0
        %898 = vmatprep.subr.bf16.mxu0 0
        %899 = vmatpush1.bf16.msra.mxu0 0
        %900 = vmatprep.subr.bf16.mxu0 0
        %901 = vmatpush1.bf16.msra.mxu0 0
        %902 = vmatprep.subr.bf16.mxu0 0
        %903 = vmatpush1.bf16.msra.mxu0 0
        %904 = vmatprep.subr.bf16.mxu0 0
        %905 = vmatpush1.bf16.msra.mxu0 0
        %906 = vmatprep.subr.bf16.mxu0 0
        %907 = vmatpush1.bf16.msra.mxu0 0
        %908 = vmatprep.subr.bf16.mxu0 0
        %909 = vmatpush1.bf16.msra.mxu0 0
        %910 = vmatprep.subr.bf16.mxu0 0
        %911 = vmatpush1.bf16.msra.mxu0 0
        %912 = vmatprep.subr.bf16.mxu0 0
        %913 = vmatpush1.bf16.msra.mxu0 0
        %914 = vmatprep.subr.bf16.mxu0 0
        %915 = vmatpush1.bf16.msra.mxu0 0
        %916 = vmatprep.subr.bf16.mxu0 0
        %917 = vmatpush1.bf16.msra.mxu0 0
        %918 = vmatprep.subr.bf16.mxu0 0
        %919 = vmatpush1.bf16.msra.mxu0 0
        %920 = vmatprep.subr.bf16.mxu0 0
        %921 = vmatpush1.bf16.msra.mxu0 0
        %922 = vmatprep.subr.bf16.mxu0 0
        %923 = vmatpush1.bf16.msra.mxu0 0
        %924 = vmatprep.subr.bf16.mxu0 0
        %925 = vmatpush1.bf16.msra.mxu0 0
        %926 = vmatprep.mubr.bf16.mxu0 0
        %927 = vmatmul.mubr.bf16.gmra.mrb[0].mxu0 %v889
        %v928 = vpop.f32.mrb[0].mxu0
        %v929 = vadd.f32 0.0, %v928
        %v930 = vpop.f32.mrb[0].mxu0
        %v931 = vpop.f32.mrb[0].mxu0
        %v932 = vpop.f32.mrb[0].mxu0
        %933 = vdwg.mxu0
        %934 = vrot.lane.b32.xlu0 %v543, 64
        %v935 = vpop.permute.xlu0 %934
        %v937 = vsel %vm546, %v788, 0
        %v940 = vsel %vm794, %v935, 0
        %942 = vmatprep.subr.bf16.mxu0 0
        %943 = vmatpush1.bf16.msra.mxu0 %v940
        %944 = vmatprep.subr.bf16.mxu0 0
        %945 = vmatpush1.bf16.msra.mxu0 0
        %946 = vmatprep.subr.bf16.mxu0 0
        %947 = vmatpush1.bf16.msra.mxu0 0
        %948 = vmatprep.subr.bf16.mxu0 0
        %949 = vmatpush1.bf16.msra.mxu0 0
        %950 = vmatprep.subr.bf16.mxu0 0
        %951 = vmatpush1.bf16.msra.mxu0 0
        %952 = vmatprep.subr.bf16.mxu0 0
        %953 = vmatpush1.bf16.msra.mxu0 0
        %954 = vmatprep.subr.bf16.mxu0 0
        %955 = vmatpush1.bf16.msra.mxu0 0
        %956 = vmatprep.subr.bf16.mxu0 0
        %957 = vmatpush1.bf16.msra.mxu0 0
        %958 = vmatprep.subr.bf16.mxu0 0
        %959 = vmatpush1.bf16.msra.mxu0 0
        %960 = vmatprep.subr.bf16.mxu0 0
        %961 = vmatpush1.bf16.msra.mxu0 0
        %962 = vmatprep.subr.bf16.mxu0 0
        %963 = vmatpush1.bf16.msra.mxu0 0
        %964 = vmatprep.subr.bf16.mxu0 0
        %965 = vmatpush1.bf16.msra.mxu0 0
        %966 = vmatprep.subr.bf16.mxu0 0
        %967 = vmatpush1.bf16.msra.mxu0 0
        %968 = vmatprep.subr.bf16.mxu0 0
        %969 = vmatpush1.bf16.msra.mxu0 0
        %970 = vmatprep.subr.bf16.mxu0 0
        %971 = vmatpush1.bf16.msra.mxu0 0
        %972 = vmatprep.subr.bf16.mxu0 0
        %973 = vmatpush1.bf16.msra.mxu0 0
        %974 = vmatprep.mubr.bf16.mxu0 0
        %975 = vmatmul.mubr.bf16.gmra.mrb[0].mxu0 %v937
        %v976 = vpop.f32.mrb[0].mxu0
        %v977 = vadd.f32 0.0, %v976
        %v978 = vpop.f32.mrb[0].mxu0
        %v979 = vpop.f32.mrb[0].mxu0
        %v980 = vpop.f32.mrb[0].mxu0
        %981 = vdwg.mxu0
        %v982 = vpack.c.bf16 %v833, %v833
        %vm983 = vcmask 60416
        %984 = vst.msk [vmem:[#allocation3] sm:$0xf] %vm983, %v982
        %v985 = vpack.c.bf16 %v881, %v881
        %v987 = vunpack.c.l.b16 %v985
        %v988 = vpack.c.b16 %v987, %v987
        %989 = vrot.lane.b32.xlu0 %v988, 8
        %v990 = vpop.permute.xlu0 %989
        %vm992 = vcmask 126016
        %993 = vst.msk [vmem:[#allocation3] sm:$0xf] %vm992, %v990
        %v994 = vpack.c.bf16 %v929, %v929
        %v996 = vunpack.c.l.b16 %v994
        %v997 = vpack.c.b16 %v996, %v996
        %998 = vrot.lane.b32.xlu0 %v997, 16
        %v999 = vpop.permute.xlu0 %998
        %vm1001 = vcmask 191616
        %1002 = vst.msk [vmem:[#allocation3] sm:$0xf] %vm1001, %v999
        %v1003 = vpack.c.bf16 %v977, %v977
        %v1005 = vunpack.c.l.b16 %v1003
        %v1006 = vpack.c.b16 %v1005, %v1005
        %1007 = vrot.lane.b32.xlu0 %v1006, 24
        %v1008 = vpop.permute.xlu0 %1007
        %vm1010 = vcmask 257216
        %1011 = vst.msk [vmem:[#allocation3] sm:$0xf] %vm1010, %v1008
        %v1012 = vld [vmem:[#allocation3] sm:$0xf]
        %v1013 = vld [vmem:[%s443] sm:$0xf]
        %v1014 = vld [vmem:[%s443 + $0x4] sm:$0xf]
        %v1015 = vld [vmem:[%s443 + $0x8] sm:$0xf]
        %v1016 = vld [vmem:[%s443 + $0xc] sm:$0xf]
        %v1017 = vlaneseq
        %v1018 = vshrl.u32 %v1017, 7
        %v1019 = vsub.s32 0, %v1018
        %v1020 = vrot.slane %v467, %v1019
        %v1025 = vunpack.c.l.b16 %v1013
        %v1026 = vunpack.c.l.b16 %v1014
        %v1027 = vunpack.c.l.b16 %v1015
        %v1028 = vunpack.c.l.b16 %v1016
        %v1029 = vpack.c.b16 %v1026, %v1025
        %v1030 = vpack.c.b16 %v1028, %v1027
        %v1034 = vsel %vm492, %v1012, 0
        %1036 = vmatprep.subr.bf16.mxu0 0
        %1037 = vmatpush1.bf16.msra.mxu0 %v1029
        %1038 = vmatprep.subr.bf16.mxu0 0
        %1039 = vmatpush1.bf16.msra.mxu0 %v1030
        %1040 = vmatprep.subr.bf16.mxu0 0
        %1041 = vmatpush1.bf16.msra.mxu0 0
        %1042 = vmatprep.subr.bf16.mxu0 0
        %1043 = vmatpush1.bf16.msra.mxu0 0
        %1044 = vmatprep.subr.bf16.mxu0 0
        %1045 = vmatpush1.bf16.msra.mxu0 0
        %1046 = vmatprep.subr.bf16.mxu0 0
        %1047 = vmatpush1.bf16.msra.mxu0 0
        %1048 = vmatprep.subr.bf16.mxu0 0
        %1049 = vmatpush1.bf16.msra.mxu0 0
        %1050 = vmatprep.subr.bf16.mxu0 0
        %1051 = vmatpush1.bf16.msra.mxu0 0
        %1052 = vmatprep.subr.bf16.mxu0 0
        %1053 = vmatpush1.bf16.msra.mxu0 0
        %1054 = vmatprep.subr.bf16.mxu0 0
        %1055 = vmatpush1.bf16.msra.mxu0 0
        %1056 = vmatprep.subr.bf16.mxu0 0
        %1057 = vmatpush1.bf16.msra.mxu0 0
        %1058 = vmatprep.subr.bf16.mxu0 0
        %1059 = vmatpush1.bf16.msra.mxu0 0
        %1060 = vmatprep.subr.bf16.mxu0 0
        %1061 = vmatpush1.bf16.msra.mxu0 0
        %1062 = vmatprep.subr.bf16.mxu0 0
        %1063 = vmatpush1.bf16.msra.mxu0 0
        %1064 = vmatprep.subr.bf16.mxu0 0
        %1065 = vmatpush1.bf16.msra.mxu0 0
        %1066 = vmatprep.subr.bf16.mxu0 0
        %1067 = vmatpush1.bf16.msra.mxu0 0
        %1068 = vmatprep.mubr.bf16.mxu0 0
        %1069 = vmatmul.mubr.bf16.gmra.mrb[0].mxu0 %v1034
        %v1070 = vpop.f32.mrb[0].mxu0
        %v1071 = vadd.f32 %v1020, %v1070
        %v1072 = vpop.f32.mrb[0].mxu0
        %v1073 = vpop.f32.mrb[0].mxu0
        %v1074 = vpop.f32.mrb[0].mxu0
        %1075 = vdwg.mxu0
        %v1076 = vadd.f32 %v466, %v1071
        %v1077 = vsel %vm492, %v1076, 0.0
        %1078 = vadd.xlane.f32.xlu0 %v1077
        %v1079 = vpop.xlane.xlu0 %1078
        %v1080 = vrcp.pop 32.0
        %v1081 = vmul.f32 %v1079, %v1080
        %v1082 = vsub.f32 %v1076, %v1081
        %v1083 = vmul.f32 %v1082, %v1082
        %v1084 = vsel %vm492, %v1083, 0.0
        %1085 = vadd.xlane.f32.xlu0 %v1084
        %v1086 = vpop.xlane.xlu0 %1085
        %v1087 = vmul.f32 %v1086, %v1080
        %v1088 = vadd.f32 %v1087, 1e-05
        %v1089 = vrsqrt.pop %v1088
        %v1090 = vmul.f32 %v1082, %v1089
        %v1091 = vlaneseq
        %v1092 = vshrl.u32 %v1091, 7
        %v1093 = vsub.s32 2, %v1092
        %v1094 = vrot.slane %v467, %v1093
        %v1095 = vmul.f32 %v1090, %v1094
        %v1096 = vlaneseq
        %v1097 = vshrl.u32 %v1096, 7
        %v1098 = vsub.s32 3, %v1097
        %v1099 = vrot.slane %v467, %v1098
        %v1100 = vadd.f32 %v1095, %v1099
        %v1101 = vpack.c.bf16 %v1100, %v1100
        %v1102 = vld [vmem:[%s448] sm:$0xf]
        %v1103 = vld [vmem:[%s448 + $0x4] sm:$0xf]
        %v1104 = vld [vmem:[%s448 + $0x8] sm:$0xf]
        %v1105 = vld [vmem:[%s448 + $0xc] sm:$0xf]
        %v1106 = vld [vmem:[%s364] sm:$0x1]
        %v1108 = vlaneseq
        %v1109 = vshrl.u32 %v1108, 7
        %v1110 = vsub.s32 0, %v1109
        %v1111 = vrot.slane %v1106, %v1110
        %v1117 = vunpack.c.l.b16 %v1102
        %v1118 = vunpack.c.l.b16 %v1103
        %v1119 = vunpack.c.l.b16 %v1104
        %v1120 = vunpack.c.l.b16 %v1105
        %v1121 = vpack.c.b16 %v1118, %v1117
        %v1122 = vpack.c.b16 %v1120, %v1119
        %v1126 = vsel %vm492, %v1101, 0
        %1128 = vmatprep.subr.bf16.mxu0 0
        %1129 = vmatpush1.bf16.msra.mxu0 %v1121
        %1130 = vmatprep.subr.bf16.mxu0 0
        %1131 = vmatpush1.bf16.msra.mxu0 %v1122
        %1132 = vmatprep.subr.bf16.mxu0 0
        %1133 = vmatpush1.bf16.msra.mxu0 0
        %1134 = vmatprep.subr.bf16.mxu0 0
        %1135 = vmatpush1.bf16.msra.mxu0 0
        %1136 = vmatprep.subr.bf16.mxu0 0
        %1137 = vmatpush1.bf16.msra.mxu0 0
        %1138 = vmatprep.subr.bf16.mxu0 0
        %1139 = vmatpush1.bf16.msra.mxu0 0
        %1140 = vmatprep.subr.bf16.mxu0 0
        %1141 = vmatpush1.bf16.msra.mxu0 0
        %1142 = vmatprep.subr.bf16.mxu0 0
        %1143 = vmatpush1.bf16.msra.mxu0 0
        %1144 = vmatprep.subr.bf16.mxu0 0
        %1145 = vmatpush1.bf16.msra.mxu0 0
        %1146 = vmatprep.subr.bf16.mxu0 0
        %1147 = vmatpush1.bf16.msra.mxu0 0
        %1148 = vmatprep.subr.bf16.mxu0 0
        %1149 = vmatpush1.bf16.msra.mxu0 0
        %1150 = vmatprep.subr.bf16.mxu0 0
        %1151 = vmatpush1.bf16.msra.mxu0 0
        %1152 = vmatprep.subr.bf16.mxu0 0
        %1153 = vmatpush1.bf16.msra.mxu0 0
        %1154 = vmatprep.subr.bf16.mxu0 0
        %1155 = vmatpush1.bf16.msra.mxu0 0
        %1156 = vmatprep.subr.bf16.mxu0 0
        %1157 = vmatpush1.bf16.msra.mxu0 0
        %1158 = vmatprep.subr.bf16.mxu0 0
        %1159 = vmatpush1.bf16.msra.mxu0 0
        %1160 = vmatprep.mubr.bf16.mxu0 0
        %1161 = vmatmul.mubr.bf16.gmra.mrb[0].mxu0 %v1126
        %v1162 = vpop.f32.mrb[0].mxu0
        %v1163 = vadd.f32 %v1111, %v1162
        %v1164 = vpop.f32.mrb[0].mxu0
        %v1165 = vpop.f32.mrb[0].mxu0
        %v1166 = vpop.f32.mrb[0].mxu0
        %1167 = vdwg.mxu0
        %v1168 = vmax.f32 %v1163, 0.0
        %v1169 = vpack.c.bf16 %v1168, %v1168
        %v1170 = vld [vmem:[%s453] sm:$0xf]
        %v1171 = vld [vmem:[%s453 + $0x4] sm:$0xf]
        %v1172 = vld [vmem:[%s453 + $0x8] sm:$0xf]
        %v1173 = vld [vmem:[%s453 + $0xc] sm:$0xf]
        %v1174 = vld [vmem:[%s453 + $0x10] sm:$0xf]
        %v1175 = vld [vmem:[%s453 + $0x14] sm:$0xf]
        %v1176 = vld [vmem:[%s453 + $0x18] sm:$0xf]
        %v1177 = vld [vmem:[%s453 + $0x1c] sm:$0xf]
        %v1178 = vlaneseq
        %v1179 = vshrl.u32 %v1178, 7
        %v1180 = vsub.s32 1, %v1179
        %v1181 = vrot.slane %v467, %v1180
        %v1190 = vunpack.c.l.b16 %v1170
        %v1191 = vunpack.c.l.b16 %v1171
        %v1192 = vunpack.c.l.b16 %v1172
        %v1193 = vunpack.c.l.b16 %v1173
        %v1194 = vunpack.c.l.b16 %v1174
        %v1195 = vunpack.c.l.b16 %v1175
        %v1196 = vunpack.c.l.b16 %v1176
        %v1197 = vunpack.c.l.b16 %v1177
        %v1198 = vpack.c.b16 %v1191, %v1190
        %v1199 = vpack.c.b16 %v1193, %v1192
        %v1200 = vpack.c.b16 %v1195, %v1194
        %v1201 = vpack.c.b16 %v1197, %v1196
        %vm1206 = vcmask 523264
        %v1208 = vsel %vm1206, %v1169, 0
        %1210 = vmatprep.subr.bf16.mxu0 0
        %1211 = vmatpush1.bf16.msra.mxu0 %v1198
        %1212 = vmatprep.subr.bf16.mxu0 0
        %1213 = vmatpush1.bf16.msra.mxu0 %v1199
        %1214 = vmatprep.subr.bf16.mxu0 0
        %1215 = vmatpush1.bf16.msra.mxu0 %v1200
        %1216 = vmatprep.subr.bf16.mxu0 0
        %1217 = vmatpush1.bf16.msra.mxu0 %v1201
        %1218 = vmatprep.subr.bf16.mxu0 0
        %1219 = vmatpush1.bf16.msra.mxu0 0
        %1220 = vmatprep.subr.bf16.mxu0 0
        %1221 = vmatpush1.bf16.msra.mxu0 0
        %1222 = vmatprep.subr.bf16.mxu0 0
        %1223 = vmatpush1.bf16.msra.mxu0 0
        %1224 = vmatprep.subr.bf16.mxu0 0
        %1225 = vmatpush1.bf16.msra.mxu0 0
        %1226 = vmatprep.subr.bf16.mxu0 0
        %1227 = vmatpush1.bf16.msra.mxu0 0
        %1228 = vmatprep.subr.bf16.mxu0 0
        %1229 = vmatpush1.bf16.msra.mxu0 0
        %1230 = vmatprep.subr.bf16.mxu0 0
        %1231 = vmatpush1.bf16.msra.mxu0 0
        %1232 = vmatprep.subr.bf16.mxu0 0
        %1233 = vmatpush1.bf16.msra.mxu0 0
        %1234 = vmatprep.subr.bf16.mxu0 0
        %1235 = vmatpush1.bf16.msra.mxu0 0
        %1236 = vmatprep.subr.bf16.mxu0 0
        %1237 = vmatpush1.bf16.msra.mxu0 0
        %1238 = vmatprep.subr.bf16.mxu0 0
        %1239 = vmatpush1.bf16.msra.mxu0 0
        %1240 = vmatprep.subr.bf16.mxu0 0
        %1241 = vmatpush1.bf16.msra.mxu0 0
        %1242 = vmatprep.mubr.bf16.mxu0 0
        %1243 = vmatmul.mubr.bf16.gmra.mrb[0].mxu0 %v1208
        %v1244 = vpop.f32.mrb[0].mxu0
        %v1245 = vadd.f32 %v1181, %v1244
        %v1246 = vpop.f32.mrb[0].mxu0
        %v1247 = vpop.f32.mrb[0].mxu0
        %v1248 = vpop.f32.mrb[0].mxu0
        %1249 = vdwg.mxu0
        %v1250 = vadd.f32 %v1100, %v1245
        %v1251 = vsel %vm492, %v1250, 0.0
        %1252 = vadd.xlane.f32.xlu0 %v1251
        %v1253 = vpop.xlane.xlu0 %1252
        %v1254 = vmul.f32 %v1253, %v1080
        %v1255 = vsub.f32 %v1250, %v1254
        %v1256 = vmul.f32 %v1255, %v1255
        %v1257 = vsel %vm492, %v1256, 0.0
        %1258 = vadd.xlane.f32.xlu0 %v1257
        %v1259 = vpop.xlane.xlu0 %1258
        %v1260 = vmul.f32 %v1259, %v1080
        %v1261 = vadd.f32 %v1260, 1e-05
        %v1262 = vrsqrt.pop %v1261
        %v1263 = vmul.f32 %v1255, %v1262
        %v1264 = vlaneseq
        %v1265 = vshrl.u32 %v1264, 7
        %v1266 = vsub.s32 4, %v1265
        %v1267 = vrot.slane %v467, %v1266
        %v1268 = vmul.f32 %v1263, %v1267
        %v1269 = vlaneseq
        %v1270 = vshrl.u32 %v1269, 7
        %v1271 = vsub.s32 5, %v1270
        %v1272 = vrot.slane %v467, %v1271
        %v1273 = vadd.f32 %v1268, %v1272
        %1274 = vst.msk [vmem:[#allocation2] sm:$0xff] %vm492, %v1273
        %p1275 = scmp.eq.s32.totalorder %s30, 1
        // Predicated region
        $region61: #{tpu_custom_call.1} parent=51 // pred_check
          %p1276 = pneg %p1275
        $region62: #{tpu_custom_call.1} parent=51 // pred_check_branch
          %1278 = sbr.rel (%p1276) target = $region64
        $region63: #{tpu_custom_call.1} parent=51 // pred_region
          %1279 = vst.msk [vmem:[%s426] sm:$0xff] %vm492, %v1273
        $region64: #{tpu_custom_call.1} parent=51 // pred_fallthru
          _
        %s1280 = sand.u32 %s253, 1
        %s1281 = scalar_lea.sflag [#allocation6], %s1280
        %s1282 = sand.u32 %s253, 1
        %s1283 = smul.addr %s1282, 8
        %s1284 = scalar_lea.vmem [#allocation7], %s1283
        // Predicated region
        $region65: #{tpu_custom_call.1} parent=51 // pred_check
          %p1285 = pneg %p263
        $region66: #{tpu_custom_call.1} parent=51 // pred_check_branch
          %1287 = sbr.rel (%p1285) target = $region68
        $region67: #{tpu_custom_call.1} parent=51 // pred_region
          %s1289 = ssub.s32 128, 128
          %1290 = vsyncadd %s1281, %s1289
          %s1291 = smul.addr %s29, 128
          %s1292 = scalar_lea.hbm %s8, %s1291
          %s1294 = sshll.u32 %s1284, 4
          %s1295 = int_to_ptr.vmem [resolvable:$true] %s1294
          %1297 = dma.vmem_to_hbm [thread:$0]  %s1295, 128, %s1292, %s1281
        $region68: #{tpu_custom_call.1} parent=51 // pred_fallthru
          _
      $region52: #{tpu_custom_call.1} parent=5 // pred_fallthru
        _
      %p1298 = scmp.le.s32.totalorder 2, %s20
      // Predicated region
      $region69: #{tpu_custom_call.1} parent=5 // pred_check
        %p1299 = pneg %p1298
      $region70: #{tpu_custom_call.1} parent=5 // pred_check_branch
        %1301 = sbr.rel (%p1299) target = $region72
      $region71: #{tpu_custom_call.1} parent=5 // pred_region
        %s1302 = ssub.s32 %s20, 2
        // Predicated region
        $region73: #{tpu_custom_call.1} parent=71 // pred_check
          %p1303 = pneg %p269
        $region74: #{tpu_custom_call.1} parent=71 // pred_check_branch
          %1305 = sbr.rel (%p1303) target = $region76
        $region75: #{tpu_custom_call.1} parent=71 // pred_region
          %s1306 = sand.u32 %s254, 1
          %s1307 = scalar_lea.sflag [#allocation6], %s1306
          %s1308 = sand.u32 %s254, 1
          %s1309 = smul.addr %s1308, 8
          %s1310 = scalar_lea.vmem [#allocation7], %s1309
          %1311 = dma.done %s1307, 128
        $region76: #{tpu_custom_call.1} parent=71 // pred_fallthru
          _
      $region72: #{tpu_custom_call.1} parent=5 // pred_fallthru
        _
    $region6: #{tpu_custom_call.1} parent=1 // loop_footer
      %s24 = sadd.s32 1, %s20
    $region7: #{tpu_custom_call.1} parent=1 // loop_footer_branch
      %19 = sbr.rel target = $region3
    $region8: #{tpu_custom_call.1} parent=1 // loop_exit
      _
    %1312 = vsyncpa [#allocation5], 1
    %s1313 = scalar_lea.sflag [#allocation5], 1
    %1314 = vsyncpa %s1313, 1
    %1315 = vsyncpa [#allocation6], 1
    %s1316 = scalar_lea.sflag [#allocation6], 1
    %1317 = vsyncpa %s1316, 1

</llo_original>
